<compile_context>
chip_gen: v7x
topology: tpu7x:2x2x1
jax: 0.10.0
libtpu: 0.0.40
codegen_flags: <defaults>
</compile_context>

<pallas_src>
import jax
import jax.numpy as jnp
from jax.experimental import pallas as pl
from jax.experimental.pallas import tpu as pltpu


def _round_up(x, m):
    return (x + m - 1) // m * m


def _ffn_kernel(x_ref, w1_ref, w3_ref, w2_ref, o_ref, acc_ref):
    j = pl.program_id(1)

    @pl.when(j == 0)
    def _init():
        acc_ref[...] = jnp.zeros_like(acc_ref)

    x = x_ref[...]                                                 # (tm, D) bf16
    # Gate / up projections for this F-tile (f32 MXU accumulation).
    h1 = jnp.dot(x, w1_ref[...], preferred_element_type=jnp.float32)   # (tm, tf)
    h3 = jnp.dot(x, w3_ref[...], preferred_element_type=jnp.float32)   # (tm, tf)
    act = (h1 * jax.nn.sigmoid(h1)) * h3                           # SiLU(h1)*h3, f32

    # Partial W2 product for this F-tile, accumulated in f32 VMEM scratch.
    acc_ref[...] += jnp.dot(act.astype(x.dtype), w2_ref[...],
                            preferred_element_type=jnp.float32)

    @pl.when(j == pl.num_programs(1) - 1)
    def _finalize():
        o_ref[...] = acc_ref[...].astype(o_ref.dtype)


def feed_forward(x, w1, w3, w2, *, tm=256, tf=None,
                 compute_dtype=jnp.bfloat16):
    """x: [T, D]; w1, w3: [D, F]; w2: [F, D]  ->  [T, D] (dtype of x)."""
    T, D = x.shape
    F = w1.shape[1]
    out_dtype = x.dtype

    # --- token tiling: cap tm for tiny inputs, pad ragged T -----------------
    tm = max(8, min(tm, _round_up(T, 8)))
    Tp = _round_up(T, tm)

    # --- F tiling: largest of (512, 256, 128) that divides F, else full F ---
    if tf is None:
        for cand in (512, 256, 128):
            if F % cand == 0:
                tf = cand
                break
        else:
            tf = F
    assert F % tf == 0, "intermediate size must be divisible by tf"
    nF = F // tf

    # --- bf16 compute copies -------------------------------------------------
    xc = x.astype(compute_dtype)
    if Tp != T:
        xc = jnp.pad(xc, ((0, Tp - T), (0, 0)))
    w1c = w1.astype(compute_dtype)
    w3c = w3.astype(compute_dtype)
    w2c = w2.astype(compute_dtype)

    # TODO(synk): if D is not a multiple of 128, pad D on the wrapper side so
    #             output stores stay lane-dense (unmasked vst).

    out = pl.pallas_call(
        _ffn_kernel,
        out_shape=jax.ShapeDtypeStruct((Tp, D), out_dtype),
        grid_spec=pltpu.PrefetchScalarGridSpec(
            num_scalar_prefetch=0,
            grid=(Tp // tm, nF),
            in_specs=[
                pl.BlockSpec((tm, D), lambda i, j: (i, 0)),     # x tile
                pl.BlockSpec((D, tf), lambda i, j: (0, j)),     # W1 tile (gate)
                pl.BlockSpec((D, tf), lambda i, j: (0, j)),     # W3 tile (up)
                pl.BlockSpec((tf, D), lambda i, j: (j, 0)),     # W2 tile (down)
            ],
            out_specs=pl.BlockSpec((tm, D), lambda i, j: (i, 0)),
            scratch_shapes=[pltpu.VMEM((tm, D), jnp.float32)],  # f32 accumulator
        ),
        compiler_params=pltpu.CompilerParams(
            dimension_semantics=("parallel", "arbitrary"),
            vmem_limit_bytes=64 * 1024 * 1024,
        ),
    )(xc, w1c, w3c, w2c)

    if Tp != T:
        out = out[:T]
    return out


def feed_forward_ref(x, w1, w3, w2):
    h1 = x @ w1
    h3 = x @ w3
    return ((h1 * jax.nn.sigmoid(h1)) * h3) @ w2


if __name__ == "__main__":
    # Small shapes consistent with the module: batch=4, seq=128, hidden=256,
    # intermediate=512 (SwiGLU). Tokens T = 512 -> 2 token tiles x 2 F tiles,
    # exercising both the parallel token axis and the accumulated F axis.
    batch, seq, hidden, inter = 4, 128, 256, 512

    key = jax.random.PRNGKey(0)
    kx, k1, k3, k2 = jax.random.split(key, 4)

    x = jax.random.normal(kx, (batch, seq, hidden), dtype=jnp.float32)
    w1 = jax.random.normal(k1, (hidden, inter), dtype=jnp.float32) * 0.02
    w3 = jax.random.normal(k3, (hidden, inter), dtype=jnp.float32) * 0.02
    w2 = jax.random.normal(k2, (inter, hidden), dtype=jnp.float32) * 0.02

    x_flat = x.reshape(batch * seq, hidden)

    out = feed_forward(x_flat, w1, w3, w2, tm=256, tf=256)
    out = jax.block_until_ready(out)

    ref = feed_forward_ref(x_flat, w1, w3, w2)
    assert out.shape == (batch * seq, hidden)
    rel = (jnp.linalg.norm(out.astype(jnp.float32) - ref)
           / jnp.linalg.norm(ref))
    assert rel < 1e-2, f"mismatch vs reference (rel L2 err {rel})"

    # Restore the [batch, seq, hidden] view (glue only).
    _ = out.reshape(batch, seq, hidden)

    print("KERNEL_OK")
</pallas_src>

<mosaic_0001>
module attributes {stable_mosaic.version = 11 : i64} {
  func.func @_ffn_kernel(%arg0: i32, %arg1: i32, %arg2: memref<256x256xbf16, #tpu.memory_space<vmem>>, %arg3: memref<256x256xbf16, #tpu.memory_space<vmem>>, %arg4: memref<256x256xbf16, #tpu.memory_space<vmem>>, %arg5: memref<256x256xbf16, #tpu.memory_space<vmem>>, %arg6: memref<256x256xf32, #tpu.memory_space<vmem>>, %arg7: memref<256x256xf32, #tpu.memory_space<vmem>>) attributes {dimension_semantics = [#tpu.dimension_semantics<parallel>, #tpu.dimension_semantics<arbitrary>], iteration_bounds = array<i64: 2, 2>, scalar_prefetch = 0 : i64, scratch_operands = 1 : i64, tpu.core_type = #tpu.core_type<tc>, window_params = [{transform_indices = @transform_0, window_bounds = array<i64: 256, 256>}, {transform_indices = @transform_1, window_bounds = array<i64: 256, 256>}, {transform_indices = @transform_2, window_bounds = array<i64: 256, 256>}, {transform_indices = @transform_3, window_bounds = array<i64: 256, 256>}, {transform_indices = @transform_4, window_bounds = array<i64: 256, 256>}]} {
    %c0_i32 = arith.constant 0 : i32
    %0 = arith.cmpi eq, %arg1, %c0_i32 : i32
    %1 = arith.extui %0 : i1 to i32
    %c0_i32_0 = arith.constant 0 : i32
    %2 = arith.cmpi ne, %1, %c0_i32_0 : i32
    scf.if %2 {
      %cst_16 = arith.constant 0.000000e+00 : f32
      %24 = vector.broadcast %cst_16 : f32 to vector<256x256xf32>
      %c0_17 = arith.constant 0 : index
      %c0_18 = arith.constant 0 : index
      %25 = vector.load %arg7[%c0_17, %c0_18] : memref<256x256xf32, #tpu.memory_space<vmem>>, vector<256x256xf32>
      tpu.vector_store %arg7[%c0_17, %c0_18], %24 {strides = array<i32>} : memref<256x256xf32, #tpu.memory_space<vmem>>, vector<256x256xf32>,
    } else {
    }
    %c0 = arith.constant 0 : index
    %c0_1 = arith.constant 0 : index
    %3 = vector.load %arg2[%c0, %c0_1] : memref<256x256xbf16, #tpu.memory_space<vmem>>, vector<256x256xbf16>
    %c0_2 = arith.constant 0 : index
    %c0_3 = arith.constant 0 : index
    %4 = vector.load %arg3[%c0_2, %c0_3] : memref<256x256xbf16, #tpu.memory_space<vmem>>, vector<256x256xbf16>
    %cst = arith.constant dense<0.000000e+00> : vector<256x256xf32>
    %5 = tpu.matmul %3, %4, %cst {dimension_numbers = #tpu.dot_dimension_numbers<[1], [0], [0], [1], [0, 0, 1, 1], [], []>} : vector<256x256xbf16>, vector<256x256xbf16>, vector<256x256xf32> -> vector<256x256xf32>
    %c0_4 = arith.constant 0 : index
    %c0_5 = arith.constant 0 : index
    %6 = vector.load %arg4[%c0_4, %c0_5] : memref<256x256xbf16, #tpu.memory_space<vmem>>, vector<256x256xbf16>
    %cst_6 = arith.constant dense<0.000000e+00> : vector<256x256xf32>
    %7 = tpu.matmul %3, %6, %cst_6 {dimension_numbers = #tpu.dot_dimension_numbers<[1], [0], [0], [1], [0, 0, 1, 1], [], []>} : vector<256x256xbf16>, vector<256x256xbf16>, vector<256x256xf32> -> vector<256x256xf32>
    %8 = arith.negf %5 : vector<256x256xf32>
    %9 = math.exp %8 : vector<256x256xf32>
    %cst_7 = arith.constant 1.000000e+00 : f32
    %10 = vector.broadcast %cst_7 : f32 to vector<256x256xf32>
    %11 = arith.addf %10, %9 : vector<256x256xf32>
    %12 = arith.divf %10, %11 : vector<256x256xf32>
    %13 = arith.mulf %5, %12 : vector<256x256xf32>
    %14 = arith.mulf %13, %7 : vector<256x256xf32>
    %c0_8 = arith.constant 0 : index
    %c0_9 = arith.constant 0 : index
    %15 = vector.load %arg7[%c0_8, %c0_9] : memref<256x256xf32, #tpu.memory_space<vmem>>, vector<256x256xf32>
    %16 = arith.truncf %14 : vector<256x256xf32> to vector<256x256xbf16>
    %c0_10 = arith.constant 0 : index
    %c0_11 = arith.constant 0 : index
    %17 = vector.load %arg5[%c0_10, %c0_11] : memref<256x256xbf16, #tpu.memory_space<vmem>>, vector<256x256xbf16>
    %cst_12 = arith.constant dense<0.000000e+00> : vector<256x256xf32>
    %18 = tpu.matmul %16, %17, %cst_12 {dimension_numbers = #tpu.dot_dimension_numbers<[1], [0], [0], [1], [0, 0, 1, 1], [], []>} : vector<256x256xbf16>, vector<256x256xbf16>, vector<256x256xf32> -> vector<256x256xf32>
    %19 = arith.addf %15, %18 : vector<256x256xf32>
    %c0_13 = arith.constant 0 : index
    %c0_14 = arith.constant 0 : index
    %20 = vector.load %arg7[%c0_13, %c0_14] : memref<256x256xf32, #tpu.memory_space<vmem>>, vector<256x256xf32>
    tpu.vector_store %arg7[%c0_13, %c0_14], %19 {strides = array<i32>} : memref<256x256xf32, #tpu.memory_space<vmem>>, vector<256x256xf32>,
    %c1_i32 = arith.constant 1 : i32
    %21 = arith.cmpi eq, %arg1, %c1_i32 : i32
    %22 = arith.extui %21 : i1 to i32
    %c0_i32_15 = arith.constant 0 : i32
    %23 = arith.cmpi ne, %22, %c0_i32_15 : i32
    scf.if %23 {
      %c0_16 = arith.constant 0 : index
      %c0_17 = arith.constant 0 : index
      %24 = vector.load %arg7[%c0_16, %c0_17] : memref<256x256xf32, #tpu.memory_space<vmem>>, vector<256x256xf32>
      %c0_18 = arith.constant 0 : index
      %c0_19 = arith.constant 0 : index
      %25 = vector.load %arg6[%c0_18, %c0_19] : memref<256x256xf32, #tpu.memory_space<vmem>>, vector<256x256xf32>
      tpu.vector_store %arg6[%c0_18, %c0_19], %24 {strides = array<i32>} : memref<256x256xf32, #tpu.memory_space<vmem>>, vector<256x256xf32>,
    } else {
    }
    return
  }
  func.func @transform_0(%arg0: i32, %arg1: i32) -> (i32, i32) {
    %c0_i32 = arith.constant 0 : i32
    %c0_i32_0 = arith.constant 0 : i32
    return %arg0, %c0_i32 : i32, i32
  }
  func.func @transform_1(%arg0: i32, %arg1: i32) -> (i32, i32) {
    %c0_i32 = arith.constant 0 : i32
    %c0_i32_0 = arith.constant 0 : i32
    return %c0_i32, %arg1 : i32, i32
  }
  func.func @transform_2(%arg0: i32, %arg1: i32) -> (i32, i32) {
    %c0_i32 = arith.constant 0 : i32
    %c0_i32_0 = arith.constant 0 : i32
    return %c0_i32, %arg1 : i32, i32
  }
  func.func @transform_3(%arg0: i32, %arg1: i32) -> (i32, i32) {
    %c0_i32 = arith.constant 0 : i32
    %c0_i32_0 = arith.constant 0 : i32
    return %arg1, %c0_i32 : i32, i32
  }
  func.func @transform_4(%arg0: i32, %arg1: i32) -> (i32, i32) {
    %c0_i32 = arith.constant 0 : i32
    %c0_i32_0 = arith.constant 0 : i32
    return %arg0, %c0_i32 : i32, i32
  }
}

</mosaic_0001>

<llo_original>
// kernel: tpu_custom_call.1
$region0: #{tpu_custom_call.1}
  #allocation0 [shape = 'u32[]', space=smem, size = 0x4, offset = 0x4, fixed_abs, tag = 'smem constant byte address 0x4 - core index']
  #allocation1 [shape = 'u32[144,128]{1,0:T(1,128)}', space=vmem, size = 0x12000, scoped, tag = 'internal scratch']
  #allocation2 [shape = 'f32[256,256]{1,0:T(8,128)}', space=vmem, size = 0x40000, scoped, tag = 'scratch operand']
  %s0 = inlined_call_operand.hbm [shape: bf16[512,256], index: 0, kind: input, shape index: {}]
  %s1 = inlined_call_operand.hbm [shape: bf16[256,512], index: 1, kind: input, shape index: {}]
  %s2 = inlined_call_operand.hbm [shape: bf16[256,512], index: 2, kind: input, shape index: {}]
  %s3 = inlined_call_operand.hbm [shape: bf16[512,256], index: 3, kind: input, shape index: {}]
  %s4 = inlined_call_operand.hbm [shape: f32[512,256], index: 4, kind: output, shape index: {}]
  %s5 = sld [smem:[#allocation0]]
  $region73: #{tpu_custom_call.1} parent=0
    _
  %s7 = ssub.s32 1, %s5
  %s8 = scalar_select 0, %s7, %s5
  $region1: #{tpu_custom_call.1} parent=0
    #allocation3 [shape = 'u8[262144]{0}', space=vmem, size = 0x40000, scoped, tag = 'input window, operand 0']
    #allocation4 [shape = 's32[2]{0}', space=sflag, size = 0x8, scoped, tag = 'scoped memory for tpu_custom_call.1']
    #allocation5 [shape = 's32[2]{0}', space=sflag, size = 0x8, scoped, tag = 'scoped memory for tpu_custom_call.1']
    #allocation6 [shape = 'u8[262144]{0}', space=vmem, size = 0x40000, scoped, tag = 'input window, operand 1']
    #allocation7 [shape = 's32[2]{0}', space=sflag, size = 0x8, scoped, tag = 'scoped memory for tpu_custom_call.1']
    #allocation8 [shape = 'u8[262144]{0}', space=vmem, size = 0x40000, scoped, tag = 'input window, operand 2']
    #allocation9 [shape = 'u8[262144]{0}', space=vmem, size = 0x40000, scoped, tag = 'input window, operand 3']
    #allocation10 [shape = 's32[2]{0}', space=sflag, size = 0x8, scoped, tag = 'scoped memory for tpu_custom_call.1']
    #allocation11 [shape = 'u8[524288]{0}', space=vmem, size = 0x80000, scoped, tag = 'output window, operand 0']
    %9 = vsyncpa [#allocation4], 0
    %s10 = scalar_lea.sflag [#allocation4], 1
    %11 = vsyncpa %s10, 0
    %12 = vsyncpa [#allocation7], 0
    %s13 = scalar_lea.sflag [#allocation7], 1
    %14 = vsyncpa %s13, 0
    %15 = vsyncpa [#allocation10], 0
    %s16 = scalar_lea.sflag [#allocation10], 1
    %17 = vsyncpa %s16, 0
    %18 = vsyncpa [#allocation5], 0
    %s19 = scalar_lea.sflag [#allocation5], 1
    %20 = vsyncpa %s19, 0
    loop: start=0, step=1, limit=6
    $region2: #{tpu_custom_call.1} parent=1 // loop_pre_header
      _
    $region3: #{tpu_custom_call.1} parent=1 // loop_header
      %s22 = sphi 0, %s26
      %p23 = scmp.ge.s32.totalorder %s22, 6
      %s29 = sphi 0, %s41
      %s30 = sphi 0, %s37
      %s31 = sphi 0, %s29
      %s32 = sphi 0, %s30
      %s33 = sphi 0, %s31
      %s34 = sphi 0, %s32
      %s44 = sphi 0, %s46
      %s47 = sphi 0, %s44
      %s48 = sphi 0, %s47
      %s64 = sphi 0, %s48
      %s70 = sphi 0, %s72
      %s73 = sphi 0, %s70
      %s74 = sphi 0, %s73
      %s90 = sphi 0, %s74
      %s96 = sphi 0, %s98
      %s99 = sphi 0, %s96
      %s100 = sphi 0, %s99
      %s116 = sphi 0, %s100
      %s122 = sphi 0, %s124
      %s125 = sphi 0, %s122
      %s126 = sphi 0, %s125
      %s142 = sphi 0, %s126
      %s148 = sphi 0, %s150
      %s151 = sphi 0, %s148
      %s152 = sphi 0, %s151
      %s168 = sphi 0, %s152
    $region4: #{tpu_custom_call.1} parent=1 // loop_header_branch
      %25 = sbr.rel (%p23) target = $region8
    $region5: #{tpu_custom_call.1} parent=1 // loop_body
      %s27 = ssub.s32 %s22, 1
      %s28 = ssub.s32 %s22, 2
      %s35 = sadd.s32 1, %s30
      %p36 = scmp.ge.s32.totalorder %s35, 2
      %s37 = scalar_select %p36, 0, %s35
      %s38 = sadd.s32 1, %s29
      %s39 = scalar_select %p36, %s38, %s29
      %p40 = scmp.ge.s32.totalorder %s39, 2
      %s41 = scalar_select %p40, 0, %s39
      %s42 = ssub.s32 %s29, %s41
      %p43 = scmp.eq.s32.totalorder %s42, 0
      %s45 = sadd.s32 %s44, 1
      %s46 = scalar_select %p43, %s44, %s45
      %p49 = pneg %p43
      %p50 = scmp.eq.s32.totalorder %s22, 3
      %p51 = por %p49, %p50
      %p52 = scmp.ne.s32.totalorder %s44, %s47
      %p53 = scmp.eq.s32.totalorder %s22, 0
      %p54 = por %p52, %p53
      %p55 = scmp.ne.s32.totalorder %s44, %s47
      %p56 = scmp.eq.s32.totalorder %s27, 3
      %p57 = por %p55, %p56
      %p58 = scmp.ne.s32.totalorder %s47, %s48
      %p59 = scmp.eq.s32.totalorder %s27, 0
      %p60 = por %p58, %p59
      %p61 = scmp.ne.s32.totalorder %s47, %s48
      %p62 = scmp.eq.s32.totalorder %s28, 3
      %p63 = por %p61, %p62
      %p65 = scmp.ne.s32.totalorder %s48, %s64
      %p66 = scmp.eq.s32.totalorder %s28, 0
      %p67 = por %p65, %p66
      %s68 = ssub.s32 %s30, %s37
      %p69 = scmp.eq.s32.totalorder %s68, 0
      %s71 = sadd.s32 %s70, 1
      %s72 = scalar_select %p69, %s70, %s71
      %p75 = pneg %p69
      %p76 = scmp.eq.s32.totalorder %s22, 3
      %p77 = por %p75, %p76
      %p78 = scmp.ne.s32.totalorder %s70, %s73
      %p79 = scmp.eq.s32.totalorder %s22, 0
      %p80 = por %p78, %p79
      %p81 = scmp.ne.s32.totalorder %s70, %s73
      %p82 = scmp.eq.s32.totalorder %s27, 3
      %p83 = por %p81, %p82
      %p84 = scmp.ne.s32.totalorder %s73, %s74
      %p85 = scmp.eq.s32.totalorder %s27, 0
      %p86 = por %p84, %p85
      %p87 = scmp.ne.s32.totalorder %s73, %s74
      %p88 = scmp.eq.s32.totalorder %s28, 3
      %p89 = por %p87, %p88
      %p91 = scmp.ne.s32.totalorder %s74, %s90
      %p92 = scmp.eq.s32.totalorder %s28, 0
      %p93 = por %p91, %p92
      %s94 = ssub.s32 %s30, %s37
      %p95 = scmp.eq.s32.totalorder %s94, 0
      %s97 = sadd.s32 %s96, 1
      %s98 = scalar_select %p95, %s96, %s97
      %p101 = pneg %p95
      %p102 = scmp.eq.s32.totalorder %s22, 3
      %p103 = por %p101, %p102
      %p104 = scmp.ne.s32.totalorder %s96, %s99
      %p105 = scmp.eq.s32.totalorder %s22, 0
      %p106 = por %p104, %p105
      %p107 = scmp.ne.s32.totalorder %s96, %s99
      %p108 = scmp.eq.s32.totalorder %s27, 3
      %p109 = por %p107, %p108
      %p110 = scmp.ne.s32.totalorder %s99, %s100
      %p111 = scmp.eq.s32.totalorder %s27, 0
      %p112 = por %p110, %p111
      %p113 = scmp.ne.s32.totalorder %s99, %s100
      %p114 = scmp.eq.s32.totalorder %s28, 3
      %p115 = por %p113, %p114
      %p117 = scmp.ne.s32.totalorder %s100, %s116
      %p118 = scmp.eq.s32.totalorder %s28, 0
      %p119 = por %p117, %p118
      %s120 = ssub.s32 %s30, %s37
      %p121 = scmp.eq.s32.totalorder %s120, 0
      %s123 = sadd.s32 %s122, 1
      %s124 = scalar_select %p121, %s122, %s123
      %p127 = pneg %p121
      %p128 = scmp.eq.s32.totalorder %s22, 3
      %p129 = por %p127, %p128
      %p130 = scmp.ne.s32.totalorder %s122, %s125
      %p131 = scmp.eq.s32.totalorder %s22, 0
      %p132 = por %p130, %p131
      %p133 = scmp.ne.s32.totalorder %s122, %s125
      %p134 = scmp.eq.s32.totalorder %s27, 3
      %p135 = por %p133, %p134
      %p136 = scmp.ne.s32.totalorder %s125, %s126
      %p137 = scmp.eq.s32.totalorder %s27, 0
      %p138 = por %p136, %p137
      %p139 = scmp.ne.s32.totalorder %s125, %s126
      %p140 = scmp.eq.s32.totalorder %s28, 3
      %p141 = por %p139, %p140
      %p143 = scmp.ne.s32.totalorder %s126, %s142
      %p144 = scmp.eq.s32.totalorder %s28, 0
      %p145 = por %p143, %p144
      %s146 = ssub.s32 %s29, %s41
      %p147 = scmp.eq.s32.totalorder %s146, 0
      %s149 = sadd.s32 %s148, 1
      %s150 = scalar_select %p147, %s148, %s149
      %p153 = pneg %p147
      %p154 = scmp.eq.s32.totalorder %s22, 3
      %p155 = por %p153, %p154
      %p156 = scmp.ne.s32.totalorder %s148, %s151
      %p157 = scmp.eq.s32.totalorder %s22, 0
      %p158 = por %p156, %p157
      %p159 = scmp.ne.s32.totalorder %s148, %s151
      %p160 = scmp.eq.s32.totalorder %s27, 3
      %p161 = por %p159, %p160
      %p162 = scmp.ne.s32.totalorder %s151, %s152
      %p163 = scmp.eq.s32.totalorder %s27, 0
      %p164 = por %p162, %p163
      %p165 = scmp.ne.s32.totalorder %s151, %s152
      %p166 = scmp.eq.s32.totalorder %s28, 3
      %p167 = por %p165, %p166
      %p169 = scmp.ne.s32.totalorder %s152, %s168
      %p170 = scmp.eq.s32.totalorder %s28, 0
      %p171 = por %p169, %p170
      %p172 = scmp.le.s32.totalorder 1, %s22
      %p173 = scmp.lt.s32.totalorder %s22, 5
      %p174 = pnand %p172, %p173
      %p175 = pneg %p174
      // Predicated region
      $region9: #{tpu_custom_call.1} parent=5 // pred_check
        _
      $region10: #{tpu_custom_call.1} parent=5 // pred_check_branch
        %177 = sbr.rel (%p174) target = $region12
      $region11: #{tpu_custom_call.1} parent=5 // pred_region
        %s178 = ssub.s32 %s22, 1
      $region12: #{tpu_custom_call.1} parent=5 // pred_fallthru
        _
      %p179 = scmp.lt.s32.totalorder %s22, 4
      // Predicated region
      $region13: #{tpu_custom_call.1} parent=5 // pred_check
        %p180 = pneg %p179
      $region14: #{tpu_custom_call.1} parent=5 // pred_check_branch
        %182 = sbr.rel (%p180) target = $region16
      $region15: #{tpu_custom_call.1} parent=5 // pred_region
        // Predicated region
        $region17: #{tpu_custom_call.1} parent=15 // pred_check
          %p183 = pneg %p54
        $region18: #{tpu_custom_call.1} parent=15 // pred_check_branch
          %185 = sbr.rel (%p183) target = $region20
        $region19: #{tpu_custom_call.1} parent=15 // pred_region
          %s186 = sand.u32 %s44, 1
          %s187 = scalar_lea.sflag [#allocation4], %s186
          %s188 = sand.u32 %s44, 1
          %s189 = smul.addr %s188, 256
          %s190 = scalar_lea.vmem [#allocation3], %s189
          %s191 = smul.u32 32, %s29
          %s193 = ssub.s32 4096, 4096
          %194 = vsyncadd %s187, %s193
          %s195 = smul.addr %s191, 2
          %s196 = smul.addr %s195, 64
          %s197 = scalar_lea.hbm %s0, %s196
          %s198 = sshll.u32 %s190, 4
          %s199 = int_to_ptr.vmem [resolvable:$true] %s198
          %204 = dma.hbm_to_vmem [thread:$0]  %s197, 4096, %s199, %s187, 128, 128, 8
        $region20: #{tpu_custom_call.1} parent=15 // pred_fallthru
          _
        // Predicated region
        $region21: #{tpu_custom_call.1} parent=15 // pred_check
          %p205 = pneg %p80
        $region22: #{tpu_custom_call.1} parent=15 // pred_check_branch
          %207 = sbr.rel (%p205) target = $region24
        $region23: #{tpu_custom_call.1} parent=15 // pred_region
          %s208 = sand.u32 %s22, 1
          %s209 = scalar_lea.sflag [#allocation7], %s208
          %s210 = sand.u32 %s70, 1
          %s211 = smul.addr %s210, 256
          %s212 = scalar_lea.vmem [#allocation6], %s211
          %s213 = smul.u32 2, %s30
          %s215 = ssub.s32 4096, 4096
          %216 = vsyncadd %s209, %s215
          %s217 = smul.addr %s213, 64
          %s218 = scalar_lea.hbm %s1, %s217
          %s219 = sshll.u32 %s212, 4
          %s220 = int_to_ptr.vmem [resolvable:$true] %s219
          %225 = dma.hbm_to_vmem [thread:$0]  %s218, 4096, %s220, %s209, 256, 128, 8
        $region24: #{tpu_custom_call.1} parent=15 // pred_fallthru
          _
        // Predicated region
        $region25: #{tpu_custom_call.1} parent=15 // pred_check
          %p226 = pneg %p106
        $region26: #{tpu_custom_call.1} parent=15 // pred_check_branch
          %228 = sbr.rel (%p226) target = $region28
        $region27: #{tpu_custom_call.1} parent=15 // pred_region
          %s229 = sand.u32 %s22, 1
          %s230 = scalar_lea.sflag [#allocation7], %s229
          %s231 = sand.u32 %s96, 1
          %s232 = smul.addr %s231, 256
          %s233 = scalar_lea.vmem [#allocation8], %s232
          %s234 = smul.u32 2, %s30
          %s236 = ssub.s32 4096, 4096
          %237 = vsyncadd %s230, %s236
          %s238 = smul.addr %s234, 64
          %s239 = scalar_lea.hbm %s2, %s238
          %s240 = sshll.u32 %s233, 4
          %s241 = int_to_ptr.vmem [resolvable:$true] %s240
          %246 = dma.hbm_to_vmem [thread:$0]  %s239, 4096, %s241, %s230, 256, 128, 8
        $region28: #{tpu_custom_call.1} parent=15 // pred_fallthru
          _
        // Predicated region
        $region29: #{tpu_custom_call.1} parent=15 // pred_check
          %p247 = pneg %p132
        $region30: #{tpu_custom_call.1} parent=15 // pred_check_branch
          %249 = sbr.rel (%p247) target = $region32
        $region31: #{tpu_custom_call.1} parent=15 // pred_region
          %s250 = sand.u32 %s122, 1
          %s251 = scalar_lea.sflag [#allocation10], %s250
          %s252 = sand.u32 %s122, 1
          %s253 = smul.addr %s252, 256
          %s254 = scalar_lea.vmem [#allocation9], %s253
          %s255 = smul.u32 32, %s30
          %s257 = ssub.s32 4096, 4096
          %258 = vsyncadd %s251, %s257
          %s259 = smul.addr %s255, 2
          %s260 = smul.addr %s259, 64
          %s261 = scalar_lea.hbm %s3, %s260
          %s262 = sshll.u32 %s254, 4
          %s263 = int_to_ptr.vmem [resolvable:$true] %s262
          %268 = dma.hbm_to_vmem [thread:$0]  %s261, 4096, %s263, %s251, 128, 128, 8
        $region32: #{tpu_custom_call.1} parent=15 // pred_fallthru
          _
      $region16: #{tpu_custom_call.1} parent=5 // pred_fallthru
        _
      %p269 = scmp.le.s32.totalorder 1, %s22
      %p270 = scmp.lt.s32.totalorder %s22, 5
      %p271 = pnand %p269, %p270
      %p272 = pneg %p271
      // Predicated region
      $region33: #{tpu_custom_call.1} parent=5 // pred_check
        _
      $region34: #{tpu_custom_call.1} parent=5 // pred_check_branch
        %274 = sbr.rel (%p271) target = $region36
      $region35: #{tpu_custom_call.1} parent=5 // pred_region
        %s275 = ssub.s32 %s22, 1
        %s276 = sand.u32 %s47, 1
        %s277 = scalar_lea.sflag [#allocation4], %s276
        %s278 = sand.u32 %s47, 1
        %s279 = smul.addr %s278, 256
        %s280 = scalar_lea.vmem [#allocation3], %s279
        // Predicated region
        $region37: #{tpu_custom_call.1} parent=35 // pred_check
          %p281 = pneg %p60
        $region38: #{tpu_custom_call.1} parent=35 // pred_check_branch
          %283 = sbr.rel (%p281) target = $region40
        $region39: #{tpu_custom_call.1} parent=35 // pred_region
          %284 = dma.done %s277, 4096
        $region40: #{tpu_custom_call.1} parent=35 // pred_fallthru
          _
        %s285 = sand.u32 %s27, 1
        %s286 = scalar_lea.sflag [#allocation7], %s285
        %s287 = sand.u32 %s73, 1
        %s288 = smul.addr %s287, 256
        %s289 = scalar_lea.vmem [#allocation6], %s288
        // Predicated region
        $region41: #{tpu_custom_call.1} parent=35 // pred_check
          %p290 = pneg %p86
        $region42: #{tpu_custom_call.1} parent=35 // pred_check_branch
          %292 = sbr.rel (%p290) target = $region44
        $region43: #{tpu_custom_call.1} parent=35 // pred_region
          %293 = dma.done %s286, 4096
        $region44: #{tpu_custom_call.1} parent=35 // pred_fallthru
          _
        %s294 = sand.u32 %s27, 1
        %s295 = scalar_lea.sflag [#allocation7], %s294
        %s296 = sand.u32 %s99, 1
        %s297 = smul.addr %s296, 256
        %s298 = scalar_lea.vmem [#allocation8], %s297
        // Predicated region
        $region45: #{tpu_custom_call.1} parent=35 // pred_check
          %p299 = pneg %p112
        $region46: #{tpu_custom_call.1} parent=35 // pred_check_branch
          %301 = sbr.rel (%p299) target = $region48
        $region47: #{tpu_custom_call.1} parent=35 // pred_region
          %302 = dma.done %s295, 4096
        $region48: #{tpu_custom_call.1} parent=35 // pred_fallthru
          _
        %s303 = sand.u32 %s125, 1
        %s304 = scalar_lea.sflag [#allocation10], %s303
        %s305 = sand.u32 %s125, 1
        %s306 = smul.addr %s305, 256
        %s307 = scalar_lea.vmem [#allocation9], %s306
        // Predicated region
        $region49: #{tpu_custom_call.1} parent=35 // pred_check
          %p308 = pneg %p138
        $region50: #{tpu_custom_call.1} parent=35 // pred_check_branch
          %310 = sbr.rel (%p308) target = $region52
        $region51: #{tpu_custom_call.1} parent=35 // pred_region
          %311 = dma.done %s304, 4096
        $region52: #{tpu_custom_call.1} parent=35 // pred_fallthru
          _
        %s312 = sand.u32 %s47, 1
        %s313 = scalar_lea.sflag [#allocation4], %s312
        %s314 = sand.u32 %s47, 1
        %s315 = smul.addr %s314, 256
        %s316 = scalar_lea.vmem [#allocation3], %s315
        %p317 = pneg %p60
        %p318 = pneg %p57
        %s319 = sand.u32 %s27, 1
        %s320 = scalar_lea.sflag [#allocation7], %s319
        %s321 = sand.u32 %s73, 1
        %s322 = smul.addr %s321, 256
        %s323 = scalar_lea.vmem [#allocation6], %s322
        %p324 = pneg %p86
        %p325 = pneg %p83
        %s326 = sand.u32 %s27, 1
        %s327 = scalar_lea.sflag [#allocation7], %s326
        %s328 = sand.u32 %s99, 1
        %s329 = smul.addr %s328, 256
        %s330 = scalar_lea.vmem [#allocation8], %s329
        %p331 = pneg %p112
        %p332 = pneg %p109
        %s333 = sand.u32 %s125, 1
        %s334 = scalar_lea.sflag [#allocation10], %s333
        %s335 = sand.u32 %s125, 1
        %s336 = smul.addr %s335, 256
        %s337 = scalar_lea.vmem [#allocation9], %s336
        %p338 = pneg %p138
        %p339 = pneg %p135
        %p340 = pneg %p164
        %p341 = pneg %p161
        %s342 = sand.u32 %s151, 1
        %s343 = scalar_lea.sflag [#allocation5], %s342
        %s344 = sand.u32 %s151, 1
        %s345 = smul.addr %s344, 512
        %s346 = scalar_lea.vmem [#allocation11], %s345
        %s347 = smul.u32 32, %s31
        %s348 = smul.u32 2, %s32
        %s349 = smul.u32 2, %s32
        %s350 = smul.u32 32, %s32
        %s351 = smul.u32 32, %s31
        %p352 = scmp.eq.s32.totalorder %s32, 0
        // Predicated region
        $region53: #{tpu_custom_call.1} parent=35 // pred_check
          %p353 = pneg %p352
        $region54: #{tpu_custom_call.1} parent=35 // pred_check_branch
          %355 = sbr.rel (%p353) target = $region56
        $region55: #{tpu_custom_call.1} parent=35 // pred_region
          %356 = vst [vmem:[#allocation2] sm:$0xff] 0.0
          %357 = vst [vmem:[#allocation2 + $0x8] sm:$0xff] 0.0
          %358 = vst [vmem:[#allocation2 + $0x10] sm:$0xff] 0.0
          %359 = vst [vmem:[#allocation2 + $0x18] sm:$0xff] 0.0
          %360 = vst [vmem:[#allocation2 + $0x20] sm:$0xff] 0.0
          %361 = vst [vmem:[#allocation2 + $0x28] sm:$0xff] 0.0
          %362 = vst [vmem:[#allocation2 + $0x30] sm:$0xff] 0.0
          %363 = vst [vmem:[#allocation2 + $0x38] sm:$0xff] 0.0
          %364 = vst [vmem:[#allocation2 + $0x40] sm:$0xff] 0.0
          %365 = vst [vmem:[#allocation2 + $0x48] sm:$0xff] 0.0
          %366 = vst [vmem:[#allocation2 + $0x50] sm:$0xff] 0.0
          %367 = vst [vmem:[#allocation2 + $0x58] sm:$0xff] 0.0
          %368 = vst [vmem:[#allocation2 + $0x60] sm:$0xff] 0.0
          %369 = vst [vmem:[#allocation2 + $0x68] sm:$0xff] 0.0
          %370 = vst [vmem:[#allocation2 + $0x70] sm:$0xff] 0.0
          %371 = vst [vmem:[#allocation2 + $0x78] sm:$0xff] 0.0
          %372 = vst [vmem:[#allocation2 + $0x80] sm:$0xff] 0.0
          %373 = vst [vmem:[#allocation2 + $0x88] sm:$0xff] 0.0
          %374 = vst [vmem:[#allocation2 + $0x90] sm:$0xff] 0.0
          %375 = vst [vmem:[#allocation2 + $0x98] sm:$0xff] 0.0
          %376 = vst [vmem:[#allocation2 + $0xa0] sm:$0xff] 0.0
          %377 = vst [vmem:[#allocation2 + $0xa8] sm:$0xff] 0.0
          %378 = vst [vmem:[#allocation2 + $0xb0] sm:$0xff] 0.0
          %379 = vst [vmem:[#allocation2 + $0xb8] sm:$0xff] 0.0
          %380 = vst [vmem:[#allocation2 + $0xc0] sm:$0xff] 0.0
          %381 = vst [vmem:[#allocation2 + $0xc8] sm:$0xff] 0.0
          %382 = vst [vmem:[#allocation2 + $0xd0] sm:$0xff] 0.0
          %383 = vst [vmem:[#allocation2 + $0xd8] sm:$0xff] 0.0
          %384 = vst [vmem:[#allocation2 + $0xe0] sm:$0xff] 0.0
          %385 = vst [vmem:[#allocation2 + $0xe8] sm:$0xff] 0.0
          %386 = vst [vmem:[#allocation2 + $0xf0] sm:$0xff] 0.0
          %387 = vst [vmem:[#allocation2 + $0xf8] sm:$0xff] 0.0
          %388 = vst [vmem:[#allocation2 + $0x100] sm:$0xff] 0.0
          %389 = vst [vmem:[#allocation2 + $0x108] sm:$0xff] 0.0
          %390 = vst [vmem:[#allocation2 + $0x110] sm:$0xff] 0.0
          %391 = vst [vmem:[#allocation2 + $0x118] sm:$0xff] 0.0
          %392 = vst [vmem:[#allocation2 + $0x120] sm:$0xff] 0.0
          %393 = vst [vmem:[#allocation2 + $0x128] sm:$0xff] 0.0
          %394 = vst [vmem:[#allocation2 + $0x130] sm:$0xff] 0.0
          %395 = vst [vmem:[#allocation2 + $0x138] sm:$0xff] 0.0
          %396 = vst [vmem:[#allocation2 + $0x140] sm:$0xff] 0.0
          %397 = vst [vmem:[#allocation2 + $0x148] sm:$0xff] 0.0
          %398 = vst [vmem:[#allocation2 + $0x150] sm:$0xff] 0.0
          %399 = vst [vmem:[#allocation2 + $0x158] sm:$0xff] 0.0
          %400 = vst [vmem:[#allocation2 + $0x160] sm:$0xff] 0.0
          %401 = vst [vmem:[#allocation2 + $0x168] sm:$0xff] 0.0
          %402 = vst [vmem:[#allocation2 + $0x170] sm:$0xff] 0.0
          %403 = vst [vmem:[#allocation2 + $0x178] sm:$0xff] 0.0
          %404 = vst [vmem:[#allocation2 + $0x180] sm:$0xff] 0.0
          %405 = vst [vmem:[#allocation2 + $0x188] sm:$0xff] 0.0
          %406 = vst [vmem:[#allocation2 + $0x190] sm:$0xff] 0.0
          %407 = vst [vmem:[#allocation2 + $0x198] sm:$0xff] 0.0
          %408 = vst [vmem:[#allocation2 + $0x1a0] sm:$0xff] 0.0
          %409 = vst [vmem:[#allocation2 + $0x1a8] sm:$0xff] 0.0
          %410 = vst [vmem:[#allocation2 + $0x1b0] sm:$0xff] 0.0
          %411 = vst [vmem:[#allocation2 + $0x1b8] sm:$0xff] 0.0
          %412 = vst [vmem:[#allocation2 + $0x1c0] sm:$0xff] 0.0
          %413 = vst [vmem:[#allocation2 + $0x1c8] sm:$0xff] 0.0
          %414 = vst [vmem:[#allocation2 + $0x1d0] sm:$0xff] 0.0
          %415 = vst [vmem:[#allocation2 + $0x1d8] sm:$0xff] 0.0
          %416 = vst [vmem:[#allocation2 + $0x1e0] sm:$0xff] 0.0
          %417 = vst [vmem:[#allocation2 + $0x1e8] sm:$0xff] 0.0
          %418 = vst [vmem:[#allocation2 + $0x1f0] sm:$0xff] 0.0
          %419 = vst [vmem:[#allocation2 + $0x1f8] sm:$0xff] 0.0
        $region56: #{tpu_custom_call.1} parent=35 // pred_fallthru
          _
        %v420 = vld [vmem:[%s280] sm:$0xff]
        %v421 = vld [vmem:[%s280 + $0x8] sm:$0xff]
        %v422 = vld [vmem:[%s280 + $0x10] sm:$0xff]
        %v423 = vld [vmem:[%s280 + $0x18] sm:$0xff]
        %v424 = vld [vmem:[%s280 + $0x20] sm:$0xff]
        %v425 = vld [vmem:[%s280 + $0x28] sm:$0xff]
        %v426 = vld [vmem:[%s280 + $0x30] sm:$0xff]
        %v427 = vld [vmem:[%s280 + $0x38] sm:$0xff]
        %v428 = vld [vmem:[%s280 + $0x40] sm:$0xff]
        %v429 = vld [vmem:[%s280 + $0x48] sm:$0xff]
        %v430 = vld [vmem:[%s280 + $0x50] sm:$0xff]
        %v431 = vld [vmem:[%s280 + $0x58] sm:$0xff]
        %v432 = vld [vmem:[%s280 + $0x60] sm:$0xff]
        %v433 = vld [vmem:[%s280 + $0x68] sm:$0xff]
        %v434 = vld [vmem:[%s280 + $0x70] sm:$0xff]
        %v435 = vld [vmem:[%s280 + $0x78] sm:$0xff]
        %v436 = vld [vmem:[%s280 + $0x80] sm:$0xff]
        %v437 = vld [vmem:[%s280 + $0x88] sm:$0xff]
        %v438 = vld [vmem:[%s280 + $0x90] sm:$0xff]
        %v439 = vld [vmem:[%s280 + $0x98] sm:$0xff]
        %v440 = vld [vmem:[%s280 + $0xa0] sm:$0xff]
        %v441 = vld [vmem:[%s280 + $0xa8] sm:$0xff]
        %v442 = vld [vmem:[%s280 + $0xb0] sm:$0xff]
        %v443 = vld [vmem:[%s280 + $0xb8] sm:$0xff]
        %v444 = vld [vmem:[%s280 + $0xc0] sm:$0xff]
        %v445 = vld [vmem:[%s280 + $0xc8] sm:$0xff]
        %v446 = vld [vmem:[%s280 + $0xd0] sm:$0xff]
        %v447 = vld [vmem:[%s280 + $0xd8] sm:$0xff]
        %v448 = vld [vmem:[%s280 + $0xe0] sm:$0xff]
        %v449 = vld [vmem:[%s280 + $0xe8] sm:$0xff]
        %v450 = vld [vmem:[%s280 + $0xf0] sm:$0xff]
        %v451 = vld [vmem:[%s280 + $0xf8] sm:$0xff]
        %v452 = vld [vmem:[%s289] sm:$0xff]
        %v453 = vld [vmem:[%s289 + $0x8] sm:$0xff]
        %v454 = vld [vmem:[%s289 + $0x10] sm:$0xff]
        %v455 = vld [vmem:[%s289 + $0x18] sm:$0xff]
        %v456 = vld [vmem:[%s289 + $0x20] sm:$0xff]
        %v457 = vld [vmem:[%s289 + $0x28] sm:$0xff]
        %v458 = vld [vmem:[%s289 + $0x30] sm:$0xff]
        %v459 = vld [vmem:[%s289 + $0x38] sm:$0xff]
        %v460 = vld [vmem:[%s289 + $0x40] sm:$0xff]
        %v461 = vld [vmem:[%s289 + $0x48] sm:$0xff]
        %v462 = vld [vmem:[%s289 + $0x50] sm:$0xff]
        %v463 = vld [vmem:[%s289 + $0x58] sm:$0xff]
        %v464 = vld [vmem:[%s289 + $0x60] sm:$0xff]
        %v465 = vld [vmem:[%s289 + $0x68] sm:$0xff]
        %v466 = vld [vmem:[%s289 + $0x70] sm:$0xff]
        %v467 = vld [vmem:[%s289 + $0x78] sm:$0xff]
        %v468 = vld [vmem:[%s289 + $0x80] sm:$0xff]
        %v469 = vld [vmem:[%s289 + $0x88] sm:$0xff]
        %v470 = vld [vmem:[%s289 + $0x90] sm:$0xff]
        %v471 = vld [vmem:[%s289 + $0x98] sm:$0xff]
        %v472 = vld [vmem:[%s289 + $0xa0] sm:$0xff]
        %v473 = vld [vmem:[%s289 + $0xa8] sm:$0xff]
        %v474 = vld [vmem:[%s289 + $0xb0] sm:$0xff]
        %v475 = vld [vmem:[%s289 + $0xb8] sm:$0xff]
        %v476 = vld [vmem:[%s289 + $0xc0] sm:$0xff]
        %v477 = vld [vmem:[%s289 + $0xc8] sm:$0xff]
        %v478 = vld [vmem:[%s289 + $0xd0] sm:$0xff]
        %v479 = vld [vmem:[%s289 + $0xd8] sm:$0xff]
        %v480 = vld [vmem:[%s289 + $0xe0] sm:$0xff]
        %v481 = vld [vmem:[%s289 + $0xe8] sm:$0xff]
        %v482 = vld [vmem:[%s289 + $0xf0] sm:$0xff]
        %v483 = vld [vmem:[%s289 + $0xf8] sm:$0xff]
        %v516 = vunpack.c.l.b16 %v420
        %v517 = vunpack.c.h.b16 %v420
        %v518 = vunpack.c.l.b16 %v421
        %v519 = vunpack.c.h.b16 %v421
        %v520 = vunpack.c.l.b16 %v422
        %v521 = vunpack.c.h.b16 %v422
        %v522 = vunpack.c.l.b16 %v423
        %v523 = vunpack.c.h.b16 %v423
        %v524 = vunpack.c.l.b16 %v424
        %v525 = vunpack.c.h.b16 %v424
        %v526 = vunpack.c.l.b16 %v425
        %v527 = vunpack.c.h.b16 %v425
        %v528 = vunpack.c.l.b16 %v426
        %v529 = vunpack.c.h.b16 %v426
        %v530 = vunpack.c.l.b16 %v427
        %v531 = vunpack.c.h.b16 %v427
        %v532 = vunpack.c.l.b16 %v428
        %v533 = vunpack.c.h.b16 %v428
        %v534 = vunpack.c.l.b16 %v429
        %v535 = vunpack.c.h.b16 %v429
        %v536 = vunpack.c.l.b16 %v430
        %v537 = vunpack.c.h.b16 %v430
        %v538 = vunpack.c.l.b16 %v431
        %v539 = vunpack.c.h.b16 %v431
        %v540 = vunpack.c.l.b16 %v432
        %v541 = vunpack.c.h.b16 %v432
        %v542 = vunpack.c.l.b16 %v433
        %v543 = vunpack.c.h.b16 %v433
        %v544 = vunpack.c.l.b16 %v434
        %v545 = vunpack.c.h.b16 %v434
        %v546 = vunpack.c.l.b16 %v435
        %v547 = vunpack.c.h.b16 %v435
        %v548 = vunpack.c.l.b16 %v436
        %v549 = vunpack.c.h.b16 %v436
        %v550 = vunpack.c.l.b16 %v437
        %v551 = vunpack.c.h.b16 %v437
        %v552 = vunpack.c.l.b16 %v438
        %v553 = vunpack.c.h.b16 %v438
        %v554 = vunpack.c.l.b16 %v439
        %v555 = vunpack.c.h.b16 %v439
        %v556 = vunpack.c.l.b16 %v440
        %v557 = vunpack.c.h.b16 %v440
        %v558 = vunpack.c.l.b16 %v441
        %v559 = vunpack.c.h.b16 %v441
        %v560 = vunpack.c.l.b16 %v442
        %v561 = vunpack.c.h.b16 %v442
        %v562 = vunpack.c.l.b16 %v443
        %v563 = vunpack.c.h.b16 %v443
        %v564 = vunpack.c.l.b16 %v444
        %v565 = vunpack.c.h.b16 %v444
        %v566 = vunpack.c.l.b16 %v445
        %v567 = vunpack.c.h.b16 %v445
        %v568 = vunpack.c.l.b16 %v446
        %v569 = vunpack.c.h.b16 %v446
        %v570 = vunpack.c.l.b16 %v447
        %v571 = vunpack.c.h.b16 %v447
        %v572 = vunpack.c.l.b16 %v448
        %v573 = vunpack.c.h.b16 %v448
        %v574 = vunpack.c.l.b16 %v449
        %v575 = vunpack.c.h.b16 %v449
        %v576 = vunpack.c.l.b16 %v450
        %v577 = vunpack.c.h.b16 %v450
        %v578 = vunpack.c.l.b16 %v451
        %v579 = vunpack.c.h.b16 %v451
        %v580 = vpack.c.b16 %v518, %v516
        %v581 = vpack.c.b16 %v519, %v517
        %v582 = vpack.c.b16 %v522, %v520
        %v583 = vpack.c.b16 %v523, %v521
        %v584 = vpack.c.b16 %v526, %v524
        %v585 = vpack.c.b16 %v527, %v525
        %v586 = vpack.c.b16 %v530, %v528
        %v587 = vpack.c.b16 %v531, %v529
        %v588 = vpack.c.b16 %v534, %v532
        %v589 = vpack.c.b16 %v535, %v533
        %v590 = vpack.c.b16 %v538, %v536
        %v591 = vpack.c.b16 %v539, %v537
        %v592 = vpack.c.b16 %v542, %v540
        %v593 = vpack.c.b16 %v543, %v541
        %v594 = vpack.c.b16 %v546, %v544
        %v595 = vpack.c.b16 %v547, %v545
        %v596 = vpack.c.b16 %v550, %v548
        %v597 = vpack.c.b16 %v551, %v549
        %v598 = vpack.c.b16 %v554, %v552
        %v599 = vpack.c.b16 %v555, %v553
        %v600 = vpack.c.b16 %v558, %v556
        %v601 = vpack.c.b16 %v559, %v557
        %v602 = vpack.c.b16 %v562, %v560
        %v603 = vpack.c.b16 %v563, %v561
        %v604 = vpack.c.b16 %v566, %v564
        %v605 = vpack.c.b16 %v567, %v565
        %v606 = vpack.c.b16 %v570, %v568
        %v607 = vpack.c.b16 %v571, %v569
        %v608 = vpack.c.b16 %v574, %v572
        %v609 = vpack.c.b16 %v575, %v573
        %v610 = vpack.c.b16 %v578, %v576
        %v611 = vpack.c.b16 %v579, %v577
        %v676 = vunpack.c.l.b16 %v452
        %v677 = vunpack.c.h.b16 %v452
        %v678 = vunpack.c.l.b16 %v453
        %v679 = vunpack.c.h.b16 %v453
        %v680 = vunpack.c.l.b16 %v454
        %v681 = vunpack.c.h.b16 %v454
        %v682 = vunpack.c.l.b16 %v455
        %v683 = vunpack.c.h.b16 %v455
        %v684 = vunpack.c.l.b16 %v456
        %v685 = vunpack.c.h.b16 %v456
        %v686 = vunpack.c.l.b16 %v457
        %v687 = vunpack.c.h.b16 %v457
        %v688 = vunpack.c.l.b16 %v458
        %v689 = vunpack.c.h.b16 %v458
        %v690 = vunpack.c.l.b16 %v459
        %v691 = vunpack.c.h.b16 %v459
        %v692 = vunpack.c.l.b16 %v460
        %v693 = vunpack.c.h.b16 %v460
        %v694 = vunpack.c.l.b16 %v461
        %v695 = vunpack.c.h.b16 %v461
        %v696 = vunpack.c.l.b16 %v462
        %v697 = vunpack.c.h.b16 %v462
        %v698 = vunpack.c.l.b16 %v463
        %v699 = vunpack.c.h.b16 %v463
        %v700 = vunpack.c.l.b16 %v464
        %v701 = vunpack.c.h.b16 %v464
        %v702 = vunpack.c.l.b16 %v465
        %v703 = vunpack.c.h.b16 %v465
        %v704 = vunpack.c.l.b16 %v466
        %v705 = vunpack.c.h.b16 %v466
        %v706 = vunpack.c.l.b16 %v467
        %v707 = vunpack.c.h.b16 %v467
        %v708 = vunpack.c.l.b16 %v468
        %v709 = vunpack.c.h.b16 %v468
        %v710 = vunpack.c.l.b16 %v469
        %v711 = vunpack.c.h.b16 %v469
        %v712 = vunpack.c.l.b16 %v470
        %v713 = vunpack.c.h.b16 %v470
        %v714 = vunpack.c.l.b16 %v471
        %v715 = vunpack.c.h.b16 %v471
        %v716 = vunpack.c.l.b16 %v472
        %v717 = vunpack.c.h.b16 %v472
        %v718 = vunpack.c.l.b16 %v473
        %v719 = vunpack.c.h.b16 %v473
        %v720 = vunpack.c.l.b16 %v474
        %v721 = vunpack.c.h.b16 %v474
        %v722 = vunpack.c.l.b16 %v475
        %v723 = vunpack.c.h.b16 %v475
        %v724 = vunpack.c.l.b16 %v476
        %v725 = vunpack.c.h.b16 %v476
        %v726 = vunpack.c.l.b16 %v477
        %v727 = vunpack.c.h.b16 %v477
        %v728 = vunpack.c.l.b16 %v478
        %v729 = vunpack.c.h.b16 %v478
        %v730 = vunpack.c.l.b16 %v479
        %v731 = vunpack.c.h.b16 %v479
        %v732 = vunpack.c.l.b16 %v480
        %v733 = vunpack.c.h.b16 %v480
        %v734 = vunpack.c.l.b16 %v481
        %v735 = vunpack.c.h.b16 %v481
        %v736 = vunpack.c.l.b16 %v482
        %v737 = vunpack.c.h.b16 %v482
        %v738 = vunpack.c.l.b16 %v483
        %v739 = vunpack.c.h.b16 %v483
        %v740 = vpack.c.b16 %v678, %v676
        %v741 = vpack.c.b16 %v679, %v677
        %v742 = vpack.c.b16 %v682, %v680
        %v743 = vpack.c.b16 %v683, %v681
        %v744 = vpack.c.b16 %v686, %v684
        %v745 = vpack.c.b16 %v687, %v685
        %v746 = vpack.c.b16 %v690, %v688
        %v747 = vpack.c.b16 %v691, %v689
        %v748 = vpack.c.b16 %v694, %v692
        %v749 = vpack.c.b16 %v695, %v693
        %v750 = vpack.c.b16 %v698, %v696
        %v751 = vpack.c.b16 %v699, %v697
        %v752 = vpack.c.b16 %v702, %v700
        %v753 = vpack.c.b16 %v703, %v701
        %v754 = vpack.c.b16 %v706, %v704
        %v755 = vpack.c.b16 %v707, %v705
        %v756 = vpack.c.b16 %v710, %v708
        %v757 = vpack.c.b16 %v711, %v709
        %v758 = vpack.c.b16 %v714, %v712
        %v759 = vpack.c.b16 %v715, %v713
        %v760 = vpack.c.b16 %v718, %v716
        %v761 = vpack.c.b16 %v719, %v717
        %v762 = vpack.c.b16 %v722, %v720
        %v763 = vpack.c.b16 %v723, %v721
        %v764 = vpack.c.b16 %v726, %v724
        %v765 = vpack.c.b16 %v727, %v725
        %v766 = vpack.c.b16 %v730, %v728
        %v767 = vpack.c.b16 %v731, %v729
        %v768 = vpack.c.b16 %v734, %v732
        %v769 = vpack.c.b16 %v735, %v733
        %v770 = vpack.c.b16 %v738, %v736
        %v771 = vpack.c.b16 %v739, %v737
        %804 = vmatprep.subr.bf16.mxu0 %v741
        %805 = vmatpush1.bf16.msra.mxu0 %v740
        %806 = vmatprep.subr.bf16.mxu0 %v743
        %807 = vmatpush1.bf16.msra.mxu0 %v742
        %808 = vmatprep.subr.bf16.mxu0 %v745
        %809 = vmatpush1.bf16.msra.mxu0 %v744
        %810 = vmatprep.subr.bf16.mxu0 %v747
        %811 = vmatpush1.bf16.msra.mxu0 %v746
        %812 = vmatprep.subr.bf16.mxu0 %v749
        %813 = vmatpush1.bf16.msra.mxu0 %v748
        %814 = vmatprep.subr.bf16.mxu0 %v751
        %815 = vmatpush1.bf16.msra.mxu0 %v750
        %816 = vmatprep.subr.bf16.mxu0 %v753
        %817 = vmatpush1.bf16.msra.mxu0 %v752
        %818 = vmatprep.subr.bf16.mxu0 %v755
        %819 = vmatpush1.bf16.msra.mxu0 %v754
        %820 = vmatprep.subr.bf16.mxu0 %v757
        %821 = vmatpush1.bf16.msra.mxu0 %v756
        %822 = vmatprep.subr.bf16.mxu0 %v759
        %823 = vmatpush1.bf16.msra.mxu0 %v758
        %824 = vmatprep.subr.bf16.mxu0 %v761
        %825 = vmatpush1.bf16.msra.mxu0 %v760
        %826 = vmatprep.subr.bf16.mxu0 %v763
        %827 = vmatpush1.bf16.msra.mxu0 %v762
        %828 = vmatprep.subr.bf16.mxu0 %v765
        %829 = vmatpush1.bf16.msra.mxu0 %v764
        %830 = vmatprep.subr.bf16.mxu0 %v767
        %831 = vmatpush1.bf16.msra.mxu0 %v766
        %832 = vmatprep.subr.bf16.mxu0 %v769
        %833 = vmatpush1.bf16.msra.mxu0 %v768
        %834 = vmatprep.subr.bf16.mxu0 %v771
        %835 = vmatpush1.bf16.msra.mxu0 %v770
        %836 = vmatprep.mubr.bf16.mxu0 %v581
        %837 = vmatmul.mubr.bf16.gmra.mrb[0].mxu0 %v580
        %v838 = vpop.f32.mrb[0].mxu0
        %v839 = vadd.f32 0.0, %v838
        %v840 = vpop.f32.mrb[0].mxu0
        %v841 = vadd.f32 0.0, %v840
        %v842 = vpop.f32.mrb[0].mxu0
        %v843 = vadd.f32 0.0, %v842
        %v844 = vpop.f32.mrb[0].mxu0
        %v845 = vadd.f32 0.0, %v844
        %846 = vmatprep.mubr.bf16.mxu0 %v583
        %847 = vmatmul.mubr.bf16.gmra.mrb[0].mxu0 %v582
        %v848 = vpop.f32.mrb[0].mxu0
        %v849 = vadd.f32 0.0, %v848
        %v850 = vpop.f32.mrb[0].mxu0
        %v851 = vadd.f32 0.0, %v850
        %v852 = vpop.f32.mrb[0].mxu0
        %v853 = vadd.f32 0.0, %v852
        %v854 = vpop.f32.mrb[0].mxu0
        %v855 = vadd.f32 0.0, %v854
        %856 = vmatprep.mubr.bf16.mxu0 %v585
        %857 = vmatmul.mubr.bf16.gmra.mrb[0].mxu0 %v584
        %v858 = vpop.f32.mrb[0].mxu0
        %v859 = vadd.f32 0.0, %v858
        %v860 = vpop.f32.mrb[0].mxu0
        %v861 = vadd.f32 0.0, %v860
        %v862 = vpop.f32.mrb[0].mxu0
        %v863 = vadd.f32 0.0, %v862
        %v864 = vpop.f32.mrb[0].mxu0
        %v865 = vadd.f32 0.0, %v864
        %866 = vmatprep.mubr.bf16.mxu0 %v587
        %867 = vmatmul.mubr.bf16.gmra.mrb[0].mxu0 %v586
        %v868 = vpop.f32.mrb[0].mxu0
        %v869 = vadd.f32 0.0, %v868
        %v870 = vpop.f32.mrb[0].mxu0
        %v871 = vadd.f32 0.0, %v870
        %v872 = vpop.f32.mrb[0].mxu0
        %v873 = vadd.f32 0.0, %v872
        %v874 = vpop.f32.mrb[0].mxu0
        %v875 = vadd.f32 0.0, %v874
        %876 = vmatprep.mubr.bf16.mxu0 %v589
        %877 = vmatmul.mubr.bf16.gmra.mrb[0].mxu0 %v588
        %v878 = vpop.f32.mrb[0].mxu0
        %v879 = vadd.f32 0.0, %v878
        %v880 = vpop.f32.mrb[0].mxu0
        %v881 = vadd.f32 0.0, %v880
        %v882 = vpop.f32.mrb[0].mxu0
        %v883 = vadd.f32 0.0, %v882
        %v884 = vpop.f32.mrb[0].mxu0
        %v885 = vadd.f32 0.0, %v884
        %886 = vmatprep.mubr.bf16.mxu0 %v591
        %887 = vmatmul.mubr.bf16.gmra.mrb[0].mxu0 %v590
        %v888 = vpop.f32.mrb[0].mxu0
        %v889 = vadd.f32 0.0, %v888
        %v890 = vpop.f32.mrb[0].mxu0
        %v891 = vadd.f32 0.0, %v890
        %v892 = vpop.f32.mrb[0].mxu0
        %v893 = vadd.f32 0.0, %v892
        %v894 = vpop.f32.mrb[0].mxu0
        %v895 = vadd.f32 0.0, %v894
        %896 = vmatprep.mubr.bf16.mxu0 %v593
        %897 = vmatmul.mubr.bf16.gmra.mrb[0].mxu0 %v592
        %v898 = vpop.f32.mrb[0].mxu0
        %v899 = vadd.f32 0.0, %v898
        %v900 = vpop.f32.mrb[0].mxu0
        %v901 = vadd.f32 0.0, %v900
        %v902 = vpop.f32.mrb[0].mxu0
        %v903 = vadd.f32 0.0, %v902
        %v904 = vpop.f32.mrb[0].mxu0
        %v905 = vadd.f32 0.0, %v904
        %906 = vmatprep.mubr.bf16.mxu0 %v595
        %907 = vmatmul.mubr.bf16.gmra.mrb[0].mxu0 %v594
        %v908 = vpop.f32.mrb[0].mxu0
        %v909 = vadd.f32 0.0, %v908
        %v910 = vpop.f32.mrb[0].mxu0
        %v911 = vadd.f32 0.0, %v910
        %v912 = vpop.f32.mrb[0].mxu0
        %v913 = vadd.f32 0.0, %v912
        %v914 = vpop.f32.mrb[0].mxu0
        %v915 = vadd.f32 0.0, %v914
        %916 = vmatprep.mubr.bf16.mxu0 %v597
        %917 = vmatmul.mubr.bf16.gmra.mrb[0].mxu0 %v596
        %v918 = vpop.f32.mrb[0].mxu0
        %v919 = vadd.f32 0.0, %v918
        %v920 = vpop.f32.mrb[0].mxu0
        %v921 = vadd.f32 0.0, %v920
        %v922 = vpop.f32.mrb[0].mxu0
        %v923 = vadd.f32 0.0, %v922
        %v924 = vpop.f32.mrb[0].mxu0
        %v925 = vadd.f32 0.0, %v924
        %926 = vmatprep.mubr.bf16.mxu0 %v599
        %927 = vmatmul.mubr.bf16.gmra.mrb[0].mxu0 %v598
        %v928 = vpop.f32.mrb[0].mxu0
        %v929 = vadd.f32 0.0, %v928
        %v930 = vpop.f32.mrb[0].mxu0
        %v931 = vadd.f32 0.0, %v930
        %v932 = vpop.f32.mrb[0].mxu0
        %v933 = vadd.f32 0.0, %v932
        %v934 = vpop.f32.mrb[0].mxu0
        %v935 = vadd.f32 0.0, %v934
        %936 = vmatprep.mubr.bf16.mxu0 %v601
        %937 = vmatmul.mubr.bf16.gmra.mrb[0].mxu0 %v600
        %v938 = vpop.f32.mrb[0].mxu0
        %v939 = vadd.f32 0.0, %v938
        %v940 = vpop.f32.mrb[0].mxu0
        %v941 = vadd.f32 0.0, %v940
        %v942 = vpop.f32.mrb[0].mxu0
        %v943 = vadd.f32 0.0, %v942
        %v944 = vpop.f32.mrb[0].mxu0
        %v945 = vadd.f32 0.0, %v944
        %946 = vmatprep.mubr.bf16.mxu0 %v603
        %947 = vmatmul.mubr.bf16.gmra.mrb[0].mxu0 %v602
        %v948 = vpop.f32.mrb[0].mxu0
        %v949 = vadd.f32 0.0, %v948
        %v950 = vpop.f32.mrb[0].mxu0
        %v951 = vadd.f32 0.0, %v950
        %v952 = vpop.f32.mrb[0].mxu0
        %v953 = vadd.f32 0.0, %v952
        %v954 = vpop.f32.mrb[0].mxu0
        %v955 = vadd.f32 0.0, %v954
        %956 = vmatprep.mubr.bf16.mxu0 %v605
        %957 = vmatmul.mubr.bf16.gmra.mrb[0].mxu0 %v604
        %v958 = vpop.f32.mrb[0].mxu0
        %v959 = vadd.f32 0.0, %v958
        %v960 = vpop.f32.mrb[0].mxu0
        %v961 = vadd.f32 0.0, %v960
        %v962 = vpop.f32.mrb[0].mxu0
        %v963 = vadd.f32 0.0, %v962
        %v964 = vpop.f32.mrb[0].mxu0
        %v965 = vadd.f32 0.0, %v964
        %966 = vmatprep.mubr.bf16.mxu0 %v607
        %967 = vmatmul.mubr.bf16.gmra.mrb[0].mxu0 %v606
        %v968 = vpop.f32.mrb[0].mxu0
        %v969 = vadd.f32 0.0, %v968
        %v970 = vpop.f32.mrb[0].mxu0
        %v971 = vadd.f32 0.0, %v970
        %v972 = vpop.f32.mrb[0].mxu0
        %v973 = vadd.f32 0.0, %v972
        %v974 = vpop.f32.mrb[0].mxu0
        %v975 = vadd.f32 0.0, %v974
        %976 = vmatprep.mubr.bf16.mxu0 %v609
        %977 = vmatmul.mubr.bf16.gmra.mrb[0].mxu0 %v608
        %v978 = vpop.f32.mrb[0].mxu0
        %v979 = vadd.f32 0.0, %v978
        %v980 = vpop.f32.mrb[0].mxu0
        %v981 = vadd.f32 0.0, %v980
        %v982 = vpop.f32.mrb[0].mxu0
        %v983 = vadd.f32 0.0, %v982
        %v984 = vpop.f32.mrb[0].mxu0
        %v985 = vadd.f32 0.0, %v984
        %986 = vmatprep.mubr.bf16.mxu0 %v611
        %987 = vmatmul.mubr.bf16.gmra.mrb[0].mxu0 %v610
        %v988 = vpop.f32.mrb[0].mxu0
        %v989 = vadd.f32 0.0, %v988
        %v990 = vpop.f32.mrb[0].mxu0
        %v991 = vadd.f32 0.0, %v990
        %v992 = vpop.f32.mrb[0].mxu0
        %v993 = vadd.f32 0.0, %v992
        %v994 = vpop.f32.mrb[0].mxu0
        %v995 = vadd.f32 0.0, %v994
        %996 = vdwg.mxu0
        %v997 = vld [vmem:[%s298] sm:$0xff]
        %v998 = vld [vmem:[%s298 + $0x8] sm:$0xff]
        %v999 = vld [vmem:[%s298 + $0x10] sm:$0xff]
        %v1000 = vld [vmem:[%s298 + $0x18] sm:$0xff]
        %v1001 = vld [vmem:[%s298 + $0x20] sm:$0xff]
        %v1002 = vld [vmem:[%s298 + $0x28] sm:$0xff]
        %v1003 = vld [vmem:[%s298 + $0x30] sm:$0xff]
        %v1004 = vld [vmem:[%s298 + $0x38] sm:$0xff]
        %v1005 = vld [vmem:[%s298 + $0x40] sm:$0xff]
        %v1006 = vld [vmem:[%s298 + $0x48] sm:$0xff]
        %v1007 = vld [vmem:[%s298 + $0x50] sm:$0xff]
        %v1008 = vld [vmem:[%s298 + $0x58] sm:$0xff]
        %v1009 = vld [vmem:[%s298 + $0x60] sm:$0xff]
        %v1010 = vld [vmem:[%s298 + $0x68] sm:$0xff]
        %v1011 = vld [vmem:[%s298 + $0x70] sm:$0xff]
        %v1012 = vld [vmem:[%s298 + $0x78] sm:$0xff]
        %v1013 = vld [vmem:[%s298 + $0x80] sm:$0xff]
        %v1014 = vld [vmem:[%s298 + $0x88] sm:$0xff]
        %v1015 = vld [vmem:[%s298 + $0x90] sm:$0xff]
        %v1016 = vld [vmem:[%s298 + $0x98] sm:$0xff]
        %v1017 = vld [vmem:[%s298 + $0xa0] sm:$0xff]
        %v1018 = vld [vmem:[%s298 + $0xa8] sm:$0xff]
        %v1019 = vld [vmem:[%s298 + $0xb0] sm:$0xff]
        %v1020 = vld [vmem:[%s298 + $0xb8] sm:$0xff]
        %v1021 = vld [vmem:[%s298 + $0xc0] sm:$0xff]
        %v1022 = vld [vmem:[%s298 + $0xc8] sm:$0xff]
        %v1023 = vld [vmem:[%s298 + $0xd0] sm:$0xff]
        %v1024 = vld [vmem:[%s298 + $0xd8] sm:$0xff]
        %v1025 = vld [vmem:[%s298 + $0xe0] sm:$0xff]
        %v1026 = vld [vmem:[%s298 + $0xe8] sm:$0xff]
        %v1027 = vld [vmem:[%s298 + $0xf0] sm:$0xff]
        %v1028 = vld [vmem:[%s298 + $0xf8] sm:$0xff]
        %v1061 = vunpack.c.l.b16 %v997
        %v1062 = vunpack.c.h.b16 %v997
        %v1063 = vunpack.c.l.b16 %v998
        %v1064 = vunpack.c.h.b16 %v998
        %v1065 = vunpack.c.l.b16 %v999
        %v1066 = vunpack.c.h.b16 %v999
        %v1067 = vunpack.c.l.b16 %v1000
        %v1068 = vunpack.c.h.b16 %v1000
        %v1069 = vunpack.c.l.b16 %v1001
        %v1070 = vunpack.c.h.b16 %v1001
        %v1071 = vunpack.c.l.b16 %v1002
        %v1072 = vunpack.c.h.b16 %v1002
        %v1073 = vunpack.c.l.b16 %v1003
        %v1074 = vunpack.c.h.b16 %v1003
        %v1075 = vunpack.c.l.b16 %v1004
        %v1076 = vunpack.c.h.b16 %v1004
        %v1077 = vunpack.c.l.b16 %v1005
        %v1078 = vunpack.c.h.b16 %v1005
        %v1079 = vunpack.c.l.b16 %v1006
        %v1080 = vunpack.c.h.b16 %v1006
        %v1081 = vunpack.c.l.b16 %v1007
        %v1082 = vunpack.c.h.b16 %v1007
        %v1083 = vunpack.c.l.b16 %v1008
        %v1084 = vunpack.c.h.b16 %v1008
        %v1085 = vunpack.c.l.b16 %v1009
        %v1086 = vunpack.c.h.b16 %v1009
        %v1087 = vunpack.c.l.b16 %v1010
        %v1088 = vunpack.c.h.b16 %v1010
        %v1089 = vunpack.c.l.b16 %v1011
        %v1090 = vunpack.c.h.b16 %v1011
        %v1091 = vunpack.c.l.b16 %v1012
        %v1092 = vunpack.c.h.b16 %v1012
        %v1093 = vunpack.c.l.b16 %v1013
        %v1094 = vunpack.c.h.b16 %v1013
        %v1095 = vunpack.c.l.b16 %v1014
        %v1096 = vunpack.c.h.b16 %v1014
        %v1097 = vunpack.c.l.b16 %v1015
        %v1098 = vunpack.c.h.b16 %v1015
        %v1099 = vunpack.c.l.b16 %v1016
        %v1100 = vunpack.c.h.b16 %v1016
        %v1101 = vunpack.c.l.b16 %v1017
        %v1102 = vunpack.c.h.b16 %v1017
        %v1103 = vunpack.c.l.b16 %v1018
        %v1104 = vunpack.c.h.b16 %v1018
        %v1105 = vunpack.c.l.b16 %v1019
        %v1106 = vunpack.c.h.b16 %v1019
        %v1107 = vunpack.c.l.b16 %v1020
        %v1108 = vunpack.c.h.b16 %v1020
        %v1109 = vunpack.c.l.b16 %v1021
        %v1110 = vunpack.c.h.b16 %v1021
        %v1111 = vunpack.c.l.b16 %v1022
        %v1112 = vunpack.c.h.b16 %v1022
        %v1113 = vunpack.c.l.b16 %v1023
        %v1114 = vunpack.c.h.b16 %v1023
        %v1115 = vunpack.c.l.b16 %v1024
        %v1116 = vunpack.c.h.b16 %v1024
        %v1117 = vunpack.c.l.b16 %v1025
        %v1118 = vunpack.c.h.b16 %v1025
        %v1119 = vunpack.c.l.b16 %v1026
        %v1120 = vunpack.c.h.b16 %v1026
        %v1121 = vunpack.c.l.b16 %v1027
        %v1122 = vunpack.c.h.b16 %v1027
        %v1123 = vunpack.c.l.b16 %v1028
        %v1124 = vunpack.c.h.b16 %v1028
        %v1125 = vpack.c.b16 %v1063, %v1061
        %v1126 = vpack.c.b16 %v1064, %v1062
        %v1127 = vpack.c.b16 %v1067, %v1065
        %v1128 = vpack.c.b16 %v1068, %v1066
        %v1129 = vpack.c.b16 %v1071, %v1069
        %v1130 = vpack.c.b16 %v1072, %v1070
        %v1131 = vpack.c.b16 %v1075, %v1073
        %v1132 = vpack.c.b16 %v1076, %v1074
        %v1133 = vpack.c.b16 %v1079, %v1077
        %v1134 = vpack.c.b16 %v1080, %v1078
        %v1135 = vpack.c.b16 %v1083, %v1081
        %v1136 = vpack.c.b16 %v1084, %v1082
        %v1137 = vpack.c.b16 %v1087, %v1085
        %v1138 = vpack.c.b16 %v1088, %v1086
        %v1139 = vpack.c.b16 %v1091, %v1089
        %v1140 = vpack.c.b16 %v1092, %v1090
        %v1141 = vpack.c.b16 %v1095, %v1093
        %v1142 = vpack.c.b16 %v1096, %v1094
        %v1143 = vpack.c.b16 %v1099, %v1097
        %v1144 = vpack.c.b16 %v1100, %v1098
        %v1145 = vpack.c.b16 %v1103, %v1101
        %v1146 = vpack.c.b16 %v1104, %v1102
        %v1147 = vpack.c.b16 %v1107, %v1105
        %v1148 = vpack.c.b16 %v1108, %v1106
        %v1149 = vpack.c.b16 %v1111, %v1109
        %v1150 = vpack.c.b16 %v1112, %v1110
        %v1151 = vpack.c.b16 %v1115, %v1113
        %v1152 = vpack.c.b16 %v1116, %v1114
        %v1153 = vpack.c.b16 %v1119, %v1117
        %v1154 = vpack.c.b16 %v1120, %v1118
        %v1155 = vpack.c.b16 %v1123, %v1121
        %v1156 = vpack.c.b16 %v1124, %v1122
        %1189 = vmatprep.subr.bf16.mxu0 %v1126
        %1190 = vmatpush1.bf16.msra.mxu0 %v1125
        %1191 = vmatprep.subr.bf16.mxu0 %v1128
        %1192 = vmatpush1.bf16.msra.mxu0 %v1127
        %1193 = vmatprep.subr.bf16.mxu0 %v1130
        %1194 = vmatpush1.bf16.msra.mxu0 %v1129
        %1195 = vmatprep.subr.bf16.mxu0 %v1132
        %1196 = vmatpush1.bf16.msra.mxu0 %v1131
        %1197 = vmatprep.subr.bf16.mxu0 %v1134
        %1198 = vmatpush1.bf16.msra.mxu0 %v1133
        %1199 = vmatprep.subr.bf16.mxu0 %v1136
        %1200 = vmatpush1.bf16.msra.mxu0 %v1135
        %1201 = vmatprep.subr.bf16.mxu0 %v1138
        %1202 = vmatpush1.bf16.msra.mxu0 %v1137
        %1203 = vmatprep.subr.bf16.mxu0 %v1140
        %1204 = vmatpush1.bf16.msra.mxu0 %v1139
        %1205 = vmatprep.subr.bf16.mxu0 %v1142
        %1206 = vmatpush1.bf16.msra.mxu0 %v1141
        %1207 = vmatprep.subr.bf16.mxu0 %v1144
        %1208 = vmatpush1.bf16.msra.mxu0 %v1143
        %1209 = vmatprep.subr.bf16.mxu0 %v1146
        %1210 = vmatpush1.bf16.msra.mxu0 %v1145
        %1211 = vmatprep.subr.bf16.mxu0 %v1148
        %1212 = vmatpush1.bf16.msra.mxu0 %v1147
        %1213 = vmatprep.subr.bf16.mxu0 %v1150
        %1214 = vmatpush1.bf16.msra.mxu0 %v1149
        %1215 = vmatprep.subr.bf16.mxu0 %v1152
        %1216 = vmatpush1.bf16.msra.mxu0 %v1151
        %1217 = vmatprep.subr.bf16.mxu0 %v1154
        %1218 = vmatpush1.bf16.msra.mxu0 %v1153
        %1219 = vmatprep.subr.bf16.mxu0 %v1156
        %1220 = vmatpush1.bf16.msra.mxu0 %v1155
        %1221 = vmatprep.mubr.bf16.mxu0 %v581
        %1222 = vmatmul.mubr.bf16.gmra.mrb[0].mxu0 %v580
        %v1223 = vpop.f32.mrb[0].mxu0
        %v1224 = vadd.f32 0.0, %v1223
        %v1225 = vpop.f32.mrb[0].mxu0
        %v1226 = vadd.f32 0.0, %v1225
        %v1227 = vpop.f32.mrb[0].mxu0
        %v1228 = vadd.f32 0.0, %v1227
        %v1229 = vpop.f32.mrb[0].mxu0
        %v1230 = vadd.f32 0.0, %v1229
        %1231 = vmatprep.mubr.bf16.mxu0 %v583
        %1232 = vmatmul.mubr.bf16.gmra.mrb[0].mxu0 %v582
        %v1233 = vpop.f32.mrb[0].mxu0
        %v1234 = vadd.f32 0.0, %v1233
        %v1235 = vpop.f32.mrb[0].mxu0
        %v1236 = vadd.f32 0.0, %v1235
        %v1237 = vpop.f32.mrb[0].mxu0
        %v1238 = vadd.f32 0.0, %v1237
        %v1239 = vpop.f32.mrb[0].mxu0
        %v1240 = vadd.f32 0.0, %v1239
        %1241 = vmatprep.mubr.bf16.mxu0 %v585
        %1242 = vmatmul.mubr.bf16.gmra.mrb[0].mxu0 %v584
        %v1243 = vpop.f32.mrb[0].mxu0
        %v1244 = vadd.f32 0.0, %v1243
        %v1245 = vpop.f32.mrb[0].mxu0
        %v1246 = vadd.f32 0.0, %v1245
        %v1247 = vpop.f32.mrb[0].mxu0
        %v1248 = vadd.f32 0.0, %v1247
        %v1249 = vpop.f32.mrb[0].mxu0
        %v1250 = vadd.f32 0.0, %v1249
        %1251 = vmatprep.mubr.bf16.mxu0 %v587
        %1252 = vmatmul.mubr.bf16.gmra.mrb[0].mxu0 %v586
        %v1253 = vpop.f32.mrb[0].mxu0
        %v1254 = vadd.f32 0.0, %v1253
        %v1255 = vpop.f32.mrb[0].mxu0
        %v1256 = vadd.f32 0.0, %v1255
        %v1257 = vpop.f32.mrb[0].mxu0
        %v1258 = vadd.f32 0.0, %v1257
        %v1259 = vpop.f32.mrb[0].mxu0
        %v1260 = vadd.f32 0.0, %v1259
        %1261 = vmatprep.mubr.bf16.mxu0 %v589
        %1262 = vmatmul.mubr.bf16.gmra.mrb[0].mxu0 %v588
        %v1263 = vpop.f32.mrb[0].mxu0
        %v1264 = vadd.f32 0.0, %v1263
        %v1265 = vpop.f32.mrb[0].mxu0
        %v1266 = vadd.f32 0.0, %v1265
        %v1267 = vpop.f32.mrb[0].mxu0
        %v1268 = vadd.f32 0.0, %v1267
        %v1269 = vpop.f32.mrb[0].mxu0
        %v1270 = vadd.f32 0.0, %v1269
        %1271 = vmatprep.mubr.bf16.mxu0 %v591
        %1272 = vmatmul.mubr.bf16.gmra.mrb[0].mxu0 %v590
        %v1273 = vpop.f32.mrb[0].mxu0
        %v1274 = vadd.f32 0.0, %v1273
        %v1275 = vpop.f32.mrb[0].mxu0
        %v1276 = vadd.f32 0.0, %v1275
        %v1277 = vpop.f32.mrb[0].mxu0
        %v1278 = vadd.f32 0.0, %v1277
        %v1279 = vpop.f32.mrb[0].mxu0
        %v1280 = vadd.f32 0.0, %v1279
        %1281 = vmatprep.mubr.bf16.mxu0 %v593
        %1282 = vmatmul.mubr.bf16.gmra.mrb[0].mxu0 %v592
        %v1283 = vpop.f32.mrb[0].mxu0
        %v1284 = vadd.f32 0.0, %v1283
        %v1285 = vpop.f32.mrb[0].mxu0
        %v1286 = vadd.f32 0.0, %v1285
        %v1287 = vpop.f32.mrb[0].mxu0
        %v1288 = vadd.f32 0.0, %v1287
        %v1289 = vpop.f32.mrb[0].mxu0
        %v1290 = vadd.f32 0.0, %v1289
        %1291 = vmatprep.mubr.bf16.mxu0 %v595
        %1292 = vmatmul.mubr.bf16.gmra.mrb[0].mxu0 %v594
        %v1293 = vpop.f32.mrb[0].mxu0
        %v1294 = vadd.f32 0.0, %v1293
        %v1295 = vpop.f32.mrb[0].mxu0
        %v1296 = vadd.f32 0.0, %v1295
        %v1297 = vpop.f32.mrb[0].mxu0
        %v1298 = vadd.f32 0.0, %v1297
        %v1299 = vpop.f32.mrb[0].mxu0
        %v1300 = vadd.f32 0.0, %v1299
        %1301 = vmatprep.mubr.bf16.mxu0 %v597
        %1302 = vmatmul.mubr.bf16.gmra.mrb[0].mxu0 %v596
        %v1303 = vpop.f32.mrb[0].mxu0
        %v1304 = vadd.f32 0.0, %v1303
        %v1305 = vpop.f32.mrb[0].mxu0
        %v1306 = vadd.f32 0.0, %v1305
        %v1307 = vpop.f32.mrb[0].mxu0
        %v1308 = vadd.f32 0.0, %v1307
        %v1309 = vpop.f32.mrb[0].mxu0
        %v1310 = vadd.f32 0.0, %v1309
        %1311 = vmatprep.mubr.bf16.mxu0 %v599
        %1312 = vmatmul.mubr.bf16.gmra.mrb[0].mxu0 %v598
        %v1313 = vpop.f32.mrb[0].mxu0
        %v1314 = vadd.f32 0.0, %v1313
        %v1315 = vpop.f32.mrb[0].mxu0
        %v1316 = vadd.f32 0.0, %v1315
        %v1317 = vpop.f32.mrb[0].mxu0
        %v1318 = vadd.f32 0.0, %v1317
        %v1319 = vpop.f32.mrb[0].mxu0
        %v1320 = vadd.f32 0.0, %v1319
        %1321 = vmatprep.mubr.bf16.mxu0 %v601
        %1322 = vmatmul.mubr.bf16.gmra.mrb[0].mxu0 %v600
        %v1323 = vpop.f32.mrb[0].mxu0
        %v1324 = vadd.f32 0.0, %v1323
        %v1325 = vpop.f32.mrb[0].mxu0
        %v1326 = vadd.f32 0.0, %v1325
        %v1327 = vpop.f32.mrb[0].mxu0
        %v1328 = vadd.f32 0.0, %v1327
        %v1329 = vpop.f32.mrb[0].mxu0
        %v1330 = vadd.f32 0.0, %v1329
        %1331 = vmatprep.mubr.bf16.mxu0 %v603
        %1332 = vmatmul.mubr.bf16.gmra.mrb[0].mxu0 %v602
        %v1333 = vpop.f32.mrb[0].mxu0
        %v1334 = vadd.f32 0.0, %v1333
        %v1335 = vpop.f32.mrb[0].mxu0
        %v1336 = vadd.f32 0.0, %v1335
        %v1337 = vpop.f32.mrb[0].mxu0
        %v1338 = vadd.f32 0.0, %v1337
        %v1339 = vpop.f32.mrb[0].mxu0
        %v1340 = vadd.f32 0.0, %v1339
        %1341 = vmatprep.mubr.bf16.mxu0 %v605
        %1342 = vmatmul.mubr.bf16.gmra.mrb[0].mxu0 %v604
        %v1343 = vpop.f32.mrb[0].mxu0
        %v1344 = vadd.f32 0.0, %v1343
        %v1345 = vpop.f32.mrb[0].mxu0
        %v1346 = vadd.f32 0.0, %v1345
        %v1347 = vpop.f32.mrb[0].mxu0
        %v1348 = vadd.f32 0.0, %v1347
        %v1349 = vpop.f32.mrb[0].mxu0
        %v1350 = vadd.f32 0.0, %v1349
        %1351 = vmatprep.mubr.bf16.mxu0 %v607
        %1352 = vmatmul.mubr.bf16.gmra.mrb[0].mxu0 %v606
        %v1353 = vpop.f32.mrb[0].mxu0
        %v1354 = vadd.f32 0.0, %v1353
        %v1355 = vpop.f32.mrb[0].mxu0
        %v1356 = vadd.f32 0.0, %v1355
        %v1357 = vpop.f32.mrb[0].mxu0
        %v1358 = vadd.f32 0.0, %v1357
        %v1359 = vpop.f32.mrb[0].mxu0
        %v1360 = vadd.f32 0.0, %v1359
        %1361 = vmatprep.mubr.bf16.mxu0 %v609
        %1362 = vmatmul.mubr.bf16.gmra.mrb[0].mxu0 %v608
        %v1363 = vpop.f32.mrb[0].mxu0
        %v1364 = vadd.f32 0.0, %v1363
        %v1365 = vpop.f32.mrb[0].mxu0
        %v1366 = vadd.f32 0.0, %v1365
        %v1367 = vpop.f32.mrb[0].mxu0
        %v1368 = vadd.f32 0.0, %v1367
        %v1369 = vpop.f32.mrb[0].mxu0
        %v1370 = vadd.f32 0.0, %v1369
        %1371 = vmatprep.mubr.bf16.mxu0 %v611
        %1372 = vmatmul.mubr.bf16.gmra.mrb[0].mxu0 %v610
        %v1373 = vpop.f32.mrb[0].mxu0
        %v1374 = vadd.f32 0.0, %v1373
        %v1375 = vpop.f32.mrb[0].mxu0
        %v1376 = vadd.f32 0.0, %v1375
        %v1377 = vpop.f32.mrb[0].mxu0
        %v1378 = vadd.f32 0.0, %v1377
        %v1379 = vpop.f32.mrb[0].mxu0
        %v1380 = vadd.f32 0.0, %v1379
        %1381 = vdwg.mxu0
        %v1382 = vxor.u32 %v839, 2147483648
        %v1383 = vxor.u32 %v841, 2147483648
        %v1384 = vxor.u32 %v843, 2147483648
        %v1385 = vxor.u32 %v845, 2147483648
        %v1386 = vxor.u32 %v849, 2147483648
        %v1387 = vxor.u32 %v851, 2147483648
        %v1388 = vxor.u32 %v853, 2147483648
        %v1389 = vxor.u32 %v855, 2147483648
        %v1390 = vxor.u32 %v859, 2147483648
        %v1391 = vxor.u32 %v861, 2147483648
        %v1392 = vxor.u32 %v863, 2147483648
        %v1393 = vxor.u32 %v865, 2147483648
        %v1394 = vxor.u32 %v869, 2147483648
        %v1395 = vxor.u32 %v871, 2147483648
        %v1396 = vxor.u32 %v873, 2147483648
        %v1397 = vxor.u32 %v875, 2147483648
        %v1398 = vxor.u32 %v879, 2147483648
        %v1399 = vxor.u32 %v881, 2147483648
        %v1400 = vxor.u32 %v883, 2147483648
        %v1401 = vxor.u32 %v885, 2147483648
        %v1402 = vxor.u32 %v889, 2147483648
        %v1403 = vxor.u32 %v891, 2147483648
        %v1404 = vxor.u32 %v893, 2147483648
        %v1405 = vxor.u32 %v895, 2147483648
        %v1406 = vxor.u32 %v899, 2147483648
        %v1407 = vxor.u32 %v901, 2147483648
        %v1408 = vxor.u32 %v903, 2147483648
        %v1409 = vxor.u32 %v905, 2147483648
        %v1410 = vxor.u32 %v909, 2147483648
        %v1411 = vxor.u32 %v911, 2147483648
        %v1412 = vxor.u32 %v913, 2147483648
        %v1413 = vxor.u32 %v915, 2147483648
        %v1414 = vxor.u32 %v919, 2147483648
        %v1415 = vxor.u32 %v921, 2147483648
        %v1416 = vxor.u32 %v923, 2147483648
        %v1417 = vxor.u32 %v925, 2147483648
        %v1418 = vxor.u32 %v929, 2147483648
        %v1419 = vxor.u32 %v931, 2147483648
        %v1420 = vxor.u32 %v933, 2147483648
        %v1421 = vxor.u32 %v935, 2147483648
        %v1422 = vxor.u32 %v939, 2147483648
        %v1423 = vxor.u32 %v941, 2147483648
        %v1424 = vxor.u32 %v943, 2147483648
        %v1425 = vxor.u32 %v945, 2147483648
        %v1426 = vxor.u32 %v949, 2147483648
        %v1427 = vxor.u32 %v951, 2147483648
        %v1428 = vxor.u32 %v953, 2147483648
        %v1429 = vxor.u32 %v955, 2147483648
        %v1430 = vxor.u32 %v959, 2147483648
        %v1431 = vxor.u32 %v961, 2147483648
        %v1432 = vxor.u32 %v963, 2147483648
        %v1433 = vxor.u32 %v965, 2147483648
        %v1434 = vxor.u32 %v969, 2147483648
        %v1435 = vxor.u32 %v971, 2147483648
        %v1436 = vxor.u32 %v973, 2147483648
        %v1437 = vxor.u32 %v975, 2147483648
        %v1438 = vxor.u32 %v979, 2147483648
        %v1439 = vxor.u32 %v981, 2147483648
        %v1440 = vxor.u32 %v983, 2147483648
        %v1441 = vxor.u32 %v985, 2147483648
        %v1442 = vxor.u32 %v989, 2147483648
        %v1443 = vxor.u32 %v991, 2147483648
        %v1444 = vxor.u32 %v993, 2147483648
        %v1445 = vxor.u32 %v995, 2147483648
        %v1446 = vmul.f32 %v1382, 1.442695
        %v1447 = vpow.pop %v1446
        %v1448 = vmul.f32 %v1383, 1.442695
        %v1449 = vpow.pop %v1448
        %v1450 = vmul.f32 %v1384, 1.442695
        %v1451 = vpow.pop %v1450
        %v1452 = vmul.f32 %v1385, 1.442695
        %v1453 = vpow.pop %v1452
        %v1454 = vmul.f32 %v1386, 1.442695
        %v1455 = vpow.pop %v1454
        %v1456 = vmul.f32 %v1387, 1.442695
        %v1457 = vpow.pop %v1456
        %v1458 = vmul.f32 %v1388, 1.442695
        %v1459 = vpow.pop %v1458
        %v1460 = vmul.f32 %v1389, 1.442695
        %v1461 = vpow.pop %v1460
        %v1462 = vmul.f32 %v1390, 1.442695
        %v1463 = vpow.pop %v1462
        %v1464 = vmul.f32 %v1391, 1.442695
        %v1465 = vpow.pop %v1464
        %v1466 = vmul.f32 %v1392, 1.442695
        %v1467 = vpow.pop %v1466
        %v1468 = vmul.f32 %v1393, 1.442695
        %v1469 = vpow.pop %v1468
        %v1470 = vmul.f32 %v1394, 1.442695
        %v1471 = vpow.pop %v1470
        %v1472 = vmul.f32 %v1395, 1.442695
        %v1473 = vpow.pop %v1472
        %v1474 = vmul.f32 %v1396, 1.442695
        %v1475 = vpow.pop %v1474
        %v1476 = vmul.f32 %v1397, 1.442695
        %v1477 = vpow.pop %v1476
        %v1478 = vmul.f32 %v1398, 1.442695
        %v1479 = vpow.pop %v1478
        %v1480 = vmul.f32 %v1399, 1.442695
        %v1481 = vpow.pop %v1480
        %v1482 = vmul.f32 %v1400, 1.442695
        %v1483 = vpow.pop %v1482
        %v1484 = vmul.f32 %v1401, 1.442695
        %v1485 = vpow.pop %v1484
        %v1486 = vmul.f32 %v1402, 1.442695
        %v1487 = vpow.pop %v1486
        %v1488 = vmul.f32 %v1403, 1.442695
        %v1489 = vpow.pop %v1488
        %v1490 = vmul.f32 %v1404, 1.442695
        %v1491 = vpow.pop %v1490
        %v1492 = vmul.f32 %v1405, 1.442695
        %v1493 = vpow.pop %v1492
        %v1494 = vmul.f32 %v1406, 1.442695
        %v1495 = vpow.pop %v1494
        %v1496 = vmul.f32 %v1407, 1.442695
        %v1497 = vpow.pop %v1496
        %v1498 = vmul.f32 %v1408, 1.442695
        %v1499 = vpow.pop %v1498
        %v1500 = vmul.f32 %v1409, 1.442695
        %v1501 = vpow.pop %v1500
        %v1502 = vmul.f32 %v1410, 1.442695
        %v1503 = vpow.pop %v1502
        %v1504 = vmul.f32 %v1411, 1.442695
        %v1505 = vpow.pop %v1504
        %v1506 = vmul.f32 %v1412, 1.442695
        %v1507 = vpow.pop %v1506
        %v1508 = vmul.f32 %v1413, 1.442695
        %v1509 = vpow.pop %v1508
        %v1510 = vmul.f32 %v1414, 1.442695
        %v1511 = vpow.pop %v1510
        %v1512 = vmul.f32 %v1415, 1.442695
        %v1513 = vpow.pop %v1512
        %v1514 = vmul.f32 %v1416, 1.442695
        %v1515 = vpow.pop %v1514
        %v1516 = vmul.f32 %v1417, 1.442695
        %v1517 = vpow.pop %v1516
        %v1518 = vmul.f32 %v1418, 1.442695
        %v1519 = vpow.pop %v1518
        %v1520 = vmul.f32 %v1419, 1.442695
        %v1521 = vpow.pop %v1520
        %v1522 = vmul.f32 %v1420, 1.442695
        %v1523 = vpow.pop %v1522
        %v1524 = vmul.f32 %v1421, 1.442695
        %v1525 = vpow.pop %v1524
        %v1526 = vmul.f32 %v1422, 1.442695
        %v1527 = vpow.pop %v1526
        %v1528 = vmul.f32 %v1423, 1.442695
        %v1529 = vpow.pop %v1528
        %v1530 = vmul.f32 %v1424, 1.442695
        %v1531 = vpow.pop %v1530
        %v1532 = vmul.f32 %v1425, 1.442695
        %v1533 = vpow.pop %v1532
        %v1534 = vmul.f32 %v1426, 1.442695
        %v1535 = vpow.pop %v1534
        %v1536 = vmul.f32 %v1427, 1.442695
        %v1537 = vpow.pop %v1536
        %v1538 = vmul.f32 %v1428, 1.442695
        %v1539 = vpow.pop %v1538
        %v1540 = vmul.f32 %v1429, 1.442695
        %v1541 = vpow.pop %v1540
        %v1542 = vmul.f32 %v1430, 1.442695
        %v1543 = vpow.pop %v1542
        %v1544 = vmul.f32 %v1431, 1.442695
        %v1545 = vpow.pop %v1544
        %v1546 = vmul.f32 %v1432, 1.442695
        %v1547 = vpow.pop %v1546
        %v1548 = vmul.f32 %v1433, 1.442695
        %v1549 = vpow.pop %v1548
        %v1550 = vmul.f32 %v1434, 1.442695
        %v1551 = vpow.pop %v1550
        %v1552 = vmul.f32 %v1435, 1.442695
        %v1553 = vpow.pop %v1552
        %v1554 = vmul.f32 %v1436, 1.442695
        %v1555 = vpow.pop %v1554
        %v1556 = vmul.f32 %v1437, 1.442695
        %v1557 = vpow.pop %v1556
        %v1558 = vmul.f32 %v1438, 1.442695
        %v1559 = vpow.pop %v1558
        %v1560 = vmul.f32 %v1439, 1.442695
        %v1561 = vpow.pop %v1560
        %v1562 = vmul.f32 %v1440, 1.442695
        %v1563 = vpow.pop %v1562
        %v1564 = vmul.f32 %v1441, 1.442695
        %v1565 = vpow.pop %v1564
        %v1566 = vmul.f32 %v1442, 1.442695
        %v1567 = vpow.pop %v1566
        %v1568 = vmul.f32 %v1443, 1.442695
        %v1569 = vpow.pop %v1568
        %v1570 = vmul.f32 %v1444, 1.442695
        %v1571 = vpow.pop %v1570
        %v1572 = vmul.f32 %v1445, 1.442695
        %v1573 = vpow.pop %v1572
        %v1574 = vadd.f32 %v1447, 1.0
        %v1575 = vadd.f32 %v1449, 1.0
        %v1576 = vadd.f32 %v1451, 1.0
        %v1577 = vadd.f32 %v1453, 1.0
        %v1578 = vadd.f32 %v1455, 1.0
        %v1579 = vadd.f32 %v1457, 1.0
        %v1580 = vadd.f32 %v1459, 1.0
        %v1581 = vadd.f32 %v1461, 1.0
        %v1582 = vadd.f32 %v1463, 1.0
        %v1583 = vadd.f32 %v1465, 1.0
        %v1584 = vadd.f32 %v1467, 1.0
        %v1585 = vadd.f32 %v1469, 1.0
        %v1586 = vadd.f32 %v1471, 1.0
        %v1587 = vadd.f32 %v1473, 1.0
        %v1588 = vadd.f32 %v1475, 1.0
        %v1589 = vadd.f32 %v1477, 1.0
        %v1590 = vadd.f32 %v1479, 1.0
        %v1591 = vadd.f32 %v1481, 1.0
        %v1592 = vadd.f32 %v1483, 1.0
        %v1593 = vadd.f32 %v1485, 1.0
        %v1594 = vadd.f32 %v1487, 1.0
        %v1595 = vadd.f32 %v1489, 1.0
        %v1596 = vadd.f32 %v1491, 1.0
        %v1597 = vadd.f32 %v1493, 1.0
        %v1598 = vadd.f32 %v1495, 1.0
        %v1599 = vadd.f32 %v1497, 1.0
        %v1600 = vadd.f32 %v1499, 1.0
        %v1601 = vadd.f32 %v1501, 1.0
        %v1602 = vadd.f32 %v1503, 1.0
        %v1603 = vadd.f32 %v1505, 1.0
        %v1604 = vadd.f32 %v1507, 1.0
        %v1605 = vadd.f32 %v1509, 1.0
        %v1606 = vadd.f32 %v1511, 1.0
        %v1607 = vadd.f32 %v1513, 1.0
        %v1608 = vadd.f32 %v1515, 1.0
        %v1609 = vadd.f32 %v1517, 1.0
        %v1610 = vadd.f32 %v1519, 1.0
        %v1611 = vadd.f32 %v1521, 1.0
        %v1612 = vadd.f32 %v1523, 1.0
        %v1613 = vadd.f32 %v1525, 1.0
        %v1614 = vadd.f32 %v1527, 1.0
        %v1615 = vadd.f32 %v1529, 1.0
        %v1616 = vadd.f32 %v1531, 1.0
        %v1617 = vadd.f32 %v1533, 1.0
        %v1618 = vadd.f32 %v1535, 1.0
        %v1619 = vadd.f32 %v1537, 1.0
        %v1620 = vadd.f32 %v1539, 1.0
        %v1621 = vadd.f32 %v1541, 1.0
        %v1622 = vadd.f32 %v1543, 1.0
        %v1623 = vadd.f32 %v1545, 1.0
        %v1624 = vadd.f32 %v1547, 1.0
        %v1625 = vadd.f32 %v1549, 1.0
        %v1626 = vadd.f32 %v1551, 1.0
        %v1627 = vadd.f32 %v1553, 1.0
        %v1628 = vadd.f32 %v1555, 1.0
        %v1629 = vadd.f32 %v1557, 1.0
        %v1630 = vadd.f32 %v1559, 1.0
        %v1631 = vadd.f32 %v1561, 1.0
        %v1632 = vadd.f32 %v1563, 1.0
        %v1633 = vadd.f32 %v1565, 1.0
        %v1634 = vadd.f32 %v1567, 1.0
        %v1635 = vadd.f32 %v1569, 1.0
        %v1636 = vadd.f32 %v1571, 1.0
        %v1637 = vadd.f32 %v1573, 1.0
        %v1638 = vrcp.pop %v1574
        %v1639 = vmul.f32 1.0, %v1638
        %v1640 = vrcp.pop %v1575
        %v1641 = vmul.f32 1.0, %v1640
        %v1642 = vrcp.pop %v1576
        %v1643 = vmul.f32 1.0, %v1642
        %v1644 = vrcp.pop %v1577
        %v1645 = vmul.f32 1.0, %v1644
        %v1646 = vrcp.pop %v1578
        %v1647 = vmul.f32 1.0, %v1646
        %v1648 = vrcp.pop %v1579
        %v1649 = vmul.f32 1.0, %v1648
        %v1650 = vrcp.pop %v1580
        %v1651 = vmul.f32 1.0, %v1650
        %v1652 = vrcp.pop %v1581
        %v1653 = vmul.f32 1.0, %v1652
        %v1654 = vrcp.pop %v1582
        %v1655 = vmul.f32 1.0, %v1654
        %v1656 = vrcp.pop %v1583
        %v1657 = vmul.f32 1.0, %v1656
        %v1658 = vrcp.pop %v1584
        %v1659 = vmul.f32 1.0, %v1658
        %v1660 = vrcp.pop %v1585
        %v1661 = vmul.f32 1.0, %v1660
        %v1662 = vrcp.pop %v1586
        %v1663 = vmul.f32 1.0, %v1662
        %v1664 = vrcp.pop %v1587
        %v1665 = vmul.f32 1.0, %v1664
        %v1666 = vrcp.pop %v1588
        %v1667 = vmul.f32 1.0, %v1666
        %v1668 = vrcp.pop %v1589
        %v1669 = vmul.f32 1.0, %v1668
        %v1670 = vrcp.pop %v1590
        %v1671 = vmul.f32 1.0, %v1670
        %v1672 = vrcp.pop %v1591
        %v1673 = vmul.f32 1.0, %v1672
        %v1674 = vrcp.pop %v1592
        %v1675 = vmul.f32 1.0, %v1674
        %v1676 = vrcp.pop %v1593
        %v1677 = vmul.f32 1.0, %v1676
        %v1678 = vrcp.pop %v1594
        %v1679 = vmul.f32 1.0, %v1678
        %v1680 = vrcp.pop %v1595
        %v1681 = vmul.f32 1.0, %v1680
        %v1682 = vrcp.pop %v1596
        %v1683 = vmul.f32 1.0, %v1682
        %v1684 = vrcp.pop %v1597
        %v1685 = vmul.f32 1.0, %v1684
        %v1686 = vrcp.pop %v1598
        %v1687 = vmul.f32 1.0, %v1686
        %v1688 = vrcp.pop %v1599
        %v1689 = vmul.f32 1.0, %v1688
        %v1690 = vrcp.pop %v1600
        %v1691 = vmul.f32 1.0, %v1690
        %v1692 = vrcp.pop %v1601
        %v1693 = vmul.f32 1.0, %v1692
        %v1694 = vrcp.pop %v1602
        %v1695 = vmul.f32 1.0, %v1694
        %v1696 = vrcp.pop %v1603
        %v1697 = vmul.f32 1.0, %v1696
        %v1698 = vrcp.pop %v1604
        %v1699 = vmul.f32 1.0, %v1698
        %v1700 = vrcp.pop %v1605
        %v1701 = vmul.f32 1.0, %v1700
        %v1702 = vrcp.pop %v1606
        %v1703 = vmul.f32 1.0, %v1702
        %v1704 = vrcp.pop %v1607
        %v1705 = vmul.f32 1.0, %v1704
        %v1706 = vrcp.pop %v1608
        %v1707 = vmul.f32 1.0, %v1706
        %v1708 = vrcp.pop %v1609
        %v1709 = vmul.f32 1.0, %v1708
        %v1710 = vrcp.pop %v1610
        %v1711 = vmul.f32 1.0, %v1710
        %v1712 = vrcp.pop %v1611
        %v1713 = vmul.f32 1.0, %v1712
        %v1714 = vrcp.pop %v1612
        %v1715 = vmul.f32 1.0, %v1714
        %v1716 = vrcp.pop %v1613
        %v1717 = vmul.f32 1.0, %v1716
        %v1718 = vrcp.pop %v1614
        %v1719 = vmul.f32 1.0, %v1718
        %v1720 = vrcp.pop %v1615
        %v1721 = vmul.f32 1.0, %v1720
        %v1722 = vrcp.pop %v1616
        %v1723 = vmul.f32 1.0, %v1722
        %v1724 = vrcp.pop %v1617
        %v1725 = vmul.f32 1.0, %v1724
        %v1726 = vrcp.pop %v1618
        %v1727 = vmul.f32 1.0, %v1726
        %v1728 = vrcp.pop %v1619
        %v1729 = vmul.f32 1.0, %v1728
        %v1730 = vrcp.pop %v1620
        %v1731 = vmul.f32 1.0, %v1730
        %v1732 = vrcp.pop %v1621
        %v1733 = vmul.f32 1.0, %v1732
        %v1734 = vrcp.pop %v1622
        %v1735 = vmul.f32 1.0, %v1734
        %v1736 = vrcp.pop %v1623
        %v1737 = vmul.f32 1.0, %v1736
        %v1738 = vrcp.pop %v1624
        %v1739 = vmul.f32 1.0, %v1738
        %v1740 = vrcp.pop %v1625
        %v1741 = vmul.f32 1.0, %v1740
        %v1742 = vrcp.pop %v1626
        %v1743 = vmul.f32 1.0, %v1742
        %v1744 = vrcp.pop %v1627
        %v1745 = vmul.f32 1.0, %v1744
        %v1746 = vrcp.pop %v1628
        %v1747 = vmul.f32 1.0, %v1746
        %v1748 = vrcp.pop %v1629
        %v1749 = vmul.f32 1.0, %v1748
        %v1750 = vrcp.pop %v1630
        %v1751 = vmul.f32 1.0, %v1750
        %v1752 = vrcp.pop %v1631
        %v1753 = vmul.f32 1.0, %v1752
        %v1754 = vrcp.pop %v1632
        %v1755 = vmul.f32 1.0, %v1754
        %v1756 = vrcp.pop %v1633
        %v1757 = vmul.f32 1.0, %v1756
        %v1758 = vrcp.pop %v1634
        %v1759 = vmul.f32 1.0, %v1758
        %v1760 = vrcp.pop %v1635
        %v1761 = vmul.f32 1.0, %v1760
        %v1762 = vrcp.pop %v1636
        %v1763 = vmul.f32 1.0, %v1762
        %v1764 = vrcp.pop %v1637
        %v1765 = vmul.f32 1.0, %v1764
        %v1766 = vmul.f32 %v839, %v1639
        %v1767 = vmul.f32 %v841, %v1641
        %v1768 = vmul.f32 %v843, %v1643
        %v1769 = vmul.f32 %v845, %v1645
        %v1770 = vmul.f32 %v849, %v1647
        %v1771 = vmul.f32 %v851, %v1649
        %v1772 = vmul.f32 %v853, %v1651
        %v1773 = vmul.f32 %v855, %v1653
        %v1774 = vmul.f32 %v859, %v1655
        %v1775 = vmul.f32 %v861, %v1657
        %v1776 = vmul.f32 %v863, %v1659
        %v1777 = vmul.f32 %v865, %v1661
        %v1778 = vmul.f32 %v869, %v1663
        %v1779 = vmul.f32 %v871, %v1665
        %v1780 = vmul.f32 %v873, %v1667
        %v1781 = vmul.f32 %v875, %v1669
        %v1782 = vmul.f32 %v879, %v1671
        %v1783 = vmul.f32 %v881, %v1673
        %v1784 = vmul.f32 %v883, %v1675
        %v1785 = vmul.f32 %v885, %v1677
        %v1786 = vmul.f32 %v889, %v1679
        %v1787 = vmul.f32 %v891, %v1681
        %v1788 = vmul.f32 %v893, %v1683
        %v1789 = vmul.f32 %v895, %v1685
        %v1790 = vmul.f32 %v899, %v1687
        %v1791 = vmul.f32 %v901, %v1689
        %v1792 = vmul.f32 %v903, %v1691
        %v1793 = vmul.f32 %v905, %v1693
        %v1794 = vmul.f32 %v909, %v1695
        %v1795 = vmul.f32 %v911, %v1697
        %v1796 = vmul.f32 %v913, %v1699
        %v1797 = vmul.f32 %v915, %v1701
        %v1798 = vmul.f32 %v919, %v1703
        %v1799 = vmul.f32 %v921, %v1705
        %v1800 = vmul.f32 %v923, %v1707
        %v1801 = vmul.f32 %v925, %v1709
        %v1802 = vmul.f32 %v929, %v1711
        %v1803 = vmul.f32 %v931, %v1713
        %v1804 = vmul.f32 %v933, %v1715
        %v1805 = vmul.f32 %v935, %v1717
        %v1806 = vmul.f32 %v939, %v1719
        %v1807 = vmul.f32 %v941, %v1721
        %v1808 = vmul.f32 %v943, %v1723
        %v1809 = vmul.f32 %v945, %v1725
        %v1810 = vmul.f32 %v949, %v1727
        %v1811 = vmul.f32 %v951, %v1729
        %v1812 = vmul.f32 %v953, %v1731
        %v1813 = vmul.f32 %v955, %v1733
        %v1814 = vmul.f32 %v959, %v1735
        %v1815 = vmul.f32 %v961, %v1737
        %v1816 = vmul.f32 %v963, %v1739
        %v1817 = vmul.f32 %v965, %v1741
        %v1818 = vmul.f32 %v969, %v1743
        %v1819 = vmul.f32 %v971, %v1745
        %v1820 = vmul.f32 %v973, %v1747
        %v1821 = vmul.f32 %v975, %v1749
        %v1822 = vmul.f32 %v979, %v1751
        %v1823 = vmul.f32 %v981, %v1753
        %v1824 = vmul.f32 %v983, %v1755
        %v1825 = vmul.f32 %v985, %v1757
        %v1826 = vmul.f32 %v989, %v1759
        %v1827 = vmul.f32 %v991, %v1761
        %v1828 = vmul.f32 %v993, %v1763
        %v1829 = vmul.f32 %v995, %v1765
        %v1830 = vmul.f32 %v1766, %v1224
        %v1831 = vmul.f32 %v1767, %v1226
        %v1832 = vmul.f32 %v1768, %v1228
        %v1833 = vmul.f32 %v1769, %v1230
        %v1834 = vmul.f32 %v1770, %v1234
        %v1835 = vmul.f32 %v1771, %v1236
        %v1836 = vmul.f32 %v1772, %v1238
        %v1837 = vmul.f32 %v1773, %v1240
        %v1838 = vmul.f32 %v1774, %v1244
        %v1839 = vmul.f32 %v1775, %v1246
        %v1840 = vmul.f32 %v1776, %v1248
        %v1841 = vmul.f32 %v1777, %v1250
        %v1842 = vmul.f32 %v1778, %v1254
        %v1843 = vmul.f32 %v1779, %v1256
        %v1844 = vmul.f32 %v1780, %v1258
        %v1845 = vmul.f32 %v1781, %v1260
        %v1846 = vmul.f32 %v1782, %v1264
        %v1847 = vmul.f32 %v1783, %v1266
        %v1848 = vmul.f32 %v1784, %v1268
        %v1849 = vmul.f32 %v1785, %v1270
        %v1850 = vmul.f32 %v1786, %v1274
        %v1851 = vmul.f32 %v1787, %v1276
        %v1852 = vmul.f32 %v1788, %v1278
        %v1853 = vmul.f32 %v1789, %v1280
        %v1854 = vmul.f32 %v1790, %v1284
        %v1855 = vmul.f32 %v1791, %v1286
        %v1856 = vmul.f32 %v1792, %v1288
        %v1857 = vmul.f32 %v1793, %v1290
        %v1858 = vmul.f32 %v1794, %v1294
        %v1859 = vmul.f32 %v1795, %v1296
        %v1860 = vmul.f32 %v1796, %v1298
        %v1861 = vmul.f32 %v1797, %v1300
        %v1862 = vmul.f32 %v1798, %v1304
        %v1863 = vmul.f32 %v1799, %v1306
        %v1864 = vmul.f32 %v1800, %v1308
        %v1865 = vmul.f32 %v1801, %v1310
        %v1866 = vmul.f32 %v1802, %v1314
        %v1867 = vmul.f32 %v1803, %v1316
        %v1868 = vmul.f32 %v1804, %v1318
        %v1869 = vmul.f32 %v1805, %v1320
        %v1870 = vmul.f32 %v1806, %v1324
        %v1871 = vmul.f32 %v1807, %v1326
        %v1872 = vmul.f32 %v1808, %v1328
        %v1873 = vmul.f32 %v1809, %v1330
        %v1874 = vmul.f32 %v1810, %v1334
        %v1875 = vmul.f32 %v1811, %v1336
        %v1876 = vmul.f32 %v1812, %v1338
        %v1877 = vmul.f32 %v1813, %v1340
        %v1878 = vmul.f32 %v1814, %v1344
        %v1879 = vmul.f32 %v1815, %v1346
        %v1880 = vmul.f32 %v1816, %v1348
        %v1881 = vmul.f32 %v1817, %v1350
        %v1882 = vmul.f32 %v1818, %v1354
        %v1883 = vmul.f32 %v1819, %v1356
        %v1884 = vmul.f32 %v1820, %v1358
        %v1885 = vmul.f32 %v1821, %v1360
        %v1886 = vmul.f32 %v1822, %v1364
        %v1887 = vmul.f32 %v1823, %v1366
        %v1888 = vmul.f32 %v1824, %v1368
        %v1889 = vmul.f32 %v1825, %v1370
        %v1890 = vmul.f32 %v1826, %v1374
        %v1891 = vmul.f32 %v1827, %v1376
        %v1892 = vmul.f32 %v1828, %v1378
        %v1893 = vmul.f32 %v1829, %v1380
        %v1894 = vld [vmem:[#allocation2] sm:$0xff]
        %v1895 = vld [vmem:[#allocation2 + $0x8] sm:$0xff]
        %v1896 = vld [vmem:[#allocation2 + $0x10] sm:$0xff]
        %v1897 = vld [vmem:[#allocation2 + $0x18] sm:$0xff]
        %v1898 = vld [vmem:[#allocation2 + $0x20] sm:$0xff]
        %v1899 = vld [vmem:[#allocation2 + $0x28] sm:$0xff]
        %v1900 = vld [vmem:[#allocation2 + $0x30] sm:$0xff]
        %v1901 = vld [vmem:[#allocation2 + $0x38] sm:$0xff]
        %v1902 = vld [vmem:[#allocation2 + $0x40] sm:$0xff]
        %v1903 = vld [vmem:[#allocation2 + $0x48] sm:$0xff]
        %v1904 = vld [vmem:[#allocation2 + $0x50] sm:$0xff]
        %v1905 = vld [vmem:[#allocation2 + $0x58] sm:$0xff]
        %v1906 = vld [vmem:[#allocation2 + $0x60] sm:$0xff]
        %v1907 = vld [vmem:[#allocation2 + $0x68] sm:$0xff]
        %v1908 = vld [vmem:[#allocation2 + $0x70] sm:$0xff]
        %v1909 = vld [vmem:[#allocation2 + $0x78] sm:$0xff]
        %v1910 = vld [vmem:[#allocation2 + $0x80] sm:$0xff]
        %v1911 = vld [vmem:[#allocation2 + $0x88] sm:$0xff]
        %v1912 = vld [vmem:[#allocation2 + $0x90] sm:$0xff]
        %v1913 = vld [vmem:[#allocation2 + $0x98] sm:$0xff]
        %v1914 = vld [vmem:[#allocation2 + $0xa0] sm:$0xff]
        %v1915 = vld [vmem:[#allocation2 + $0xa8] sm:$0xff]
        %v1916 = vld [vmem:[#allocation2 + $0xb0] sm:$0xff]
        %v1917 = vld [vmem:[#allocation2 + $0xb8] sm:$0xff]
        %v1918 = vld [vmem:[#allocation2 + $0xc0] sm:$0xff]
        %v1919 = vld [vmem:[#allocation2 + $0xc8] sm:$0xff]
        %v1920 = vld [vmem:[#allocation2 + $0xd0] sm:$0xff]
        %v1921 = vld [vmem:[#allocation2 + $0xd8] sm:$0xff]
        %v1922 = vld [vmem:[#allocation2 + $0xe0] sm:$0xff]
        %v1923 = vld [vmem:[#allocation2 + $0xe8] sm:$0xff]
        %v1924 = vld [vmem:[#allocation2 + $0xf0] sm:$0xff]
        %v1925 = vld [vmem:[#allocation2 + $0xf8] sm:$0xff]
        %v1926 = vld [vmem:[#allocation2 + $0x100] sm:$0xff]
        %v1927 = vld [vmem:[#allocation2 + $0x108] sm:$0xff]
        %v1928 = vld [vmem:[#allocation2 + $0x110] sm:$0xff]
        %v1929 = vld [vmem:[#allocation2 + $0x118] sm:$0xff]
        %v1930 = vld [vmem:[#allocation2 + $0x120] sm:$0xff]
        %v1931 = vld [vmem:[#allocation2 + $0x128] sm:$0xff]
        %v1932 = vld [vmem:[#allocation2 + $0x130] sm:$0xff]
        %v1933 = vld [vmem:[#allocation2 + $0x138] sm:$0xff]
        %v1934 = vld [vmem:[#allocation2 + $0x140] sm:$0xff]
        %v1935 = vld [vmem:[#allocation2 + $0x148] sm:$0xff]
        %v1936 = vld [vmem:[#allocation2 + $0x150] sm:$0xff]
        %v1937 = vld [vmem:[#allocation2 + $0x158] sm:$0xff]
        %v1938 = vld [vmem:[#allocation2 + $0x160] sm:$0xff]
        %v1939 = vld [vmem:[#allocation2 + $0x168] sm:$0xff]
        %v1940 = vld [vmem:[#allocation2 + $0x170] sm:$0xff]
        %v1941 = vld [vmem:[#allocation2 + $0x178] sm:$0xff]
        %v1942 = vld [vmem:[#allocation2 + $0x180] sm:$0xff]
        %v1943 = vld [vmem:[#allocation2 + $0x188] sm:$0xff]
        %v1944 = vld [vmem:[#allocation2 + $0x190] sm:$0xff]
        %v1945 = vld [vmem:[#allocation2 + $0x198] sm:$0xff]
        %v1946 = vld [vmem:[#allocation2 + $0x1a0] sm:$0xff]
        %v1947 = vld [vmem:[#allocation2 + $0x1a8] sm:$0xff]
        %v1948 = vld [vmem:[#allocation2 + $0x1b0] sm:$0xff]
        %v1949 = vld [vmem:[#allocation2 + $0x1b8] sm:$0xff]
        %v1950 = vld [vmem:[#allocation2 + $0x1c0] sm:$0xff]
        %v1951 = vld [vmem:[#allocation2 + $0x1c8] sm:$0xff]
        %v1952 = vld [vmem:[#allocation2 + $0x1d0] sm:$0xff]
        %v1953 = vld [vmem:[#allocation2 + $0x1d8] sm:$0xff]
        %v1954 = vld [vmem:[#allocation2 + $0x1e0] sm:$0xff]
        %v1955 = vld [vmem:[#allocation2 + $0x1e8] sm:$0xff]
        %v1956 = vld [vmem:[#allocation2 + $0x1f0] sm:$0xff]
        %v1957 = vld [vmem:[#allocation2 + $0x1f8] sm:$0xff]
        %v1958 = vpack.c.bf16 %v1832, %v1830
        %v1959 = vpack.c.bf16 %v1833, %v1831
        %v1960 = vpack.c.bf16 %v1836, %v1834
        %v1961 = vpack.c.bf16 %v1837, %v1835
        %v1962 = vpack.c.bf16 %v1840, %v1838
        %v1963 = vpack.c.bf16 %v1841, %v1839
        %v1964 = vpack.c.bf16 %v1844, %v1842
        %v1965 = vpack.c.bf16 %v1845, %v1843
        %v1966 = vpack.c.bf16 %v1848, %v1846
        %v1967 = vpack.c.bf16 %v1849, %v1847
        %v1968 = vpack.c.bf16 %v1852, %v1850
        %v1969 = vpack.c.bf16 %v1853, %v1851
        %v1970 = vpack.c.bf16 %v1856, %v1854
        %v1971 = vpack.c.bf16 %v1857, %v1855
        %v1972 = vpack.c.bf16 %v1860, %v1858
        %v1973 = vpack.c.bf16 %v1861, %v1859
        %v1974 = vpack.c.bf16 %v1864, %v1862
        %v1975 = vpack.c.bf16 %v1865, %v1863
        %v1976 = vpack.c.bf16 %v1868, %v1866
        %v1977 = vpack.c.bf16 %v1869, %v1867
        %v1978 = vpack.c.bf16 %v1872, %v1870
        %v1979 = vpack.c.bf16 %v1873, %v1871
        %v1980 = vpack.c.bf16 %v1876, %v1874
        %v1981 = vpack.c.bf16 %v1877, %v1875
        %v1982 = vpack.c.bf16 %v1880, %v1878
        %v1983 = vpack.c.bf16 %v1881, %v1879
        %v1984 = vpack.c.bf16 %v1884, %v1882
        %v1985 = vpack.c.bf16 %v1885, %v1883
        %v1986 = vpack.c.bf16 %v1888, %v1886
        %v1987 = vpack.c.bf16 %v1889, %v1887
        %v1988 = vpack.c.bf16 %v1892, %v1890
        %v1989 = vpack.c.bf16 %v1893, %v1891
        %v1990 = vld [vmem:[%s307] sm:$0xff]
        %v1991 = vld [vmem:[%s307 + $0x8] sm:$0xff]
        %v1992 = vld [vmem:[%s307 + $0x10] sm:$0xff]
        %v1993 = vld [vmem:[%s307 + $0x18] sm:$0xff]
        %v1994 = vld [vmem:[%s307 + $0x20] sm:$0xff]
        %v1995 = vld [vmem:[%s307 + $0x28] sm:$0xff]
        %v1996 = vld [vmem:[%s307 + $0x30] sm:$0xff]
        %v1997 = vld [vmem:[%s307 + $0x38] sm:$0xff]
        %v1998 = vld [vmem:[%s307 + $0x40] sm:$0xff]
        %v1999 = vld [vmem:[%s307 + $0x48] sm:$0xff]
        %v2000 = vld [vmem:[%s307 + $0x50] sm:$0xff]
        %v2001 = vld [vmem:[%s307 + $0x58] sm:$0xff]
        %v2002 = vld [vmem:[%s307 + $0x60] sm:$0xff]
        %v2003 = vld [vmem:[%s307 + $0x68] sm:$0xff]
        %v2004 = vld [vmem:[%s307 + $0x70] sm:$0xff]
        %v2005 = vld [vmem:[%s307 + $0x78] sm:$0xff]
        %v2006 = vld [vmem:[%s307 + $0x80] sm:$0xff]
        %v2007 = vld [vmem:[%s307 + $0x88] sm:$0xff]
        %v2008 = vld [vmem:[%s307 + $0x90] sm:$0xff]
        %v2009 = vld [vmem:[%s307 + $0x98] sm:$0xff]
        %v2010 = vld [vmem:[%s307 + $0xa0] sm:$0xff]
        %v2011 = vld [vmem:[%s307 + $0xa8] sm:$0xff]
        %v2012 = vld [vmem:[%s307 + $0xb0] sm:$0xff]
        %v2013 = vld [vmem:[%s307 + $0xb8] sm:$0xff]
        %v2014 = vld [vmem:[%s307 + $0xc0] sm:$0xff]
        %v2015 = vld [vmem:[%s307 + $0xc8] sm:$0xff]
        %v2016 = vld [vmem:[%s307 + $0xd0] sm:$0xff]
        %v2017 = vld [vmem:[%s307 + $0xd8] sm:$0xff]
        %v2018 = vld [vmem:[%s307 + $0xe0] sm:$0xff]
        %v2019 = vld [vmem:[%s307 + $0xe8] sm:$0xff]
        %v2020 = vld [vmem:[%s307 + $0xf0] sm:$0xff]
        %v2021 = vld [vmem:[%s307 + $0xf8] sm:$0xff]
        %v2054 = vunpack.c.l.b16 %v1990
        %v2055 = vunpack.c.h.b16 %v1990
        %v2056 = vunpack.c.l.b16 %v1991
        %v2057 = vunpack.c.h.b16 %v1991
        %v2058 = vunpack.c.l.b16 %v1992
        %v2059 = vunpack.c.h.b16 %v1992
        %v2060 = vunpack.c.l.b16 %v1993
        %v2061 = vunpack.c.h.b16 %v1993
        %v2062 = vunpack.c.l.b16 %v1994
        %v2063 = vunpack.c.h.b16 %v1994
        %v2064 = vunpack.c.l.b16 %v1995
        %v2065 = vunpack.c.h.b16 %v1995
        %v2066 = vunpack.c.l.b16 %v1996
        %v2067 = vunpack.c.h.b16 %v1996
        %v2068 = vunpack.c.l.b16 %v1997
        %v2069 = vunpack.c.h.b16 %v1997
        %v2070 = vunpack.c.l.b16 %v1998
        %v2071 = vunpack.c.h.b16 %v1998
        %v2072 = vunpack.c.l.b16 %v1999
        %v2073 = vunpack.c.h.b16 %v1999
        %v2074 = vunpack.c.l.b16 %v2000
        %v2075 = vunpack.c.h.b16 %v2000
        %v2076 = vunpack.c.l.b16 %v2001
        %v2077 = vunpack.c.h.b16 %v2001
        %v2078 = vunpack.c.l.b16 %v2002
        %v2079 = vunpack.c.h.b16 %v2002
        %v2080 = vunpack.c.l.b16 %v2003
        %v2081 = vunpack.c.h.b16 %v2003
        %v2082 = vunpack.c.l.b16 %v2004
        %v2083 = vunpack.c.h.b16 %v2004
        %v2084 = vunpack.c.l.b16 %v2005
        %v2085 = vunpack.c.h.b16 %v2005
        %v2086 = vunpack.c.l.b16 %v2006
        %v2087 = vunpack.c.h.b16 %v2006
        %v2088 = vunpack.c.l.b16 %v2007
        %v2089 = vunpack.c.h.b16 %v2007
        %v2090 = vunpack.c.l.b16 %v2008
        %v2091 = vunpack.c.h.b16 %v2008
        %v2092 = vunpack.c.l.b16 %v2009
        %v2093 = vunpack.c.h.b16 %v2009
        %v2094 = vunpack.c.l.b16 %v2010
        %v2095 = vunpack.c.h.b16 %v2010
        %v2096 = vunpack.c.l.b16 %v2011
        %v2097 = vunpack.c.h.b16 %v2011
        %v2098 = vunpack.c.l.b16 %v2012
        %v2099 = vunpack.c.h.b16 %v2012
        %v2100 = vunpack.c.l.b16 %v2013
        %v2101 = vunpack.c.h.b16 %v2013
        %v2102 = vunpack.c.l.b16 %v2014
        %v2103 = vunpack.c.h.b16 %v2014
        %v2104 = vunpack.c.l.b16 %v2015
        %v2105 = vunpack.c.h.b16 %v2015
        %v2106 = vunpack.c.l.b16 %v2016
        %v2107 = vunpack.c.h.b16 %v2016
        %v2108 = vunpack.c.l.b16 %v2017
        %v2109 = vunpack.c.h.b16 %v2017
        %v2110 = vunpack.c.l.b16 %v2018
        %v2111 = vunpack.c.h.b16 %v2018
        %v2112 = vunpack.c.l.b16 %v2019
        %v2113 = vunpack.c.h.b16 %v2019
        %v2114 = vunpack.c.l.b16 %v2020
        %v2115 = vunpack.c.h.b16 %v2020
        %v2116 = vunpack.c.l.b16 %v2021
        %v2117 = vunpack.c.h.b16 %v2021
        %v2118 = vpack.c.b16 %v2056, %v2054
        %v2119 = vpack.c.b16 %v2057, %v2055
        %v2120 = vpack.c.b16 %v2060, %v2058
        %v2121 = vpack.c.b16 %v2061, %v2059
        %v2122 = vpack.c.b16 %v2064, %v2062
        %v2123 = vpack.c.b16 %v2065, %v2063
        %v2124 = vpack.c.b16 %v2068, %v2066
        %v2125 = vpack.c.b16 %v2069, %v2067
        %v2126 = vpack.c.b16 %v2072, %v2070
        %v2127 = vpack.c.b16 %v2073, %v2071
        %v2128 = vpack.c.b16 %v2076, %v2074
        %v2129 = vpack.c.b16 %v2077, %v2075
        %v2130 = vpack.c.b16 %v2080, %v2078
        %v2131 = vpack.c.b16 %v2081, %v2079
        %v2132 = vpack.c.b16 %v2084, %v2082
        %v2133 = vpack.c.b16 %v2085, %v2083
        %v2134 = vpack.c.b16 %v2088, %v2086
        %v2135 = vpack.c.b16 %v2089, %v2087
        %v2136 = vpack.c.b16 %v2092, %v2090
        %v2137 = vpack.c.b16 %v2093, %v2091
        %v2138 = vpack.c.b16 %v2096, %v2094
        %v2139 = vpack.c.b16 %v2097, %v2095
        %v2140 = vpack.c.b16 %v2100, %v2098
        %v2141 = vpack.c.b16 %v2101, %v2099
        %v2142 = vpack.c.b16 %v2104, %v2102
        %v2143 = vpack.c.b16 %v2105, %v2103
        %v2144 = vpack.c.b16 %v2108, %v2106
        %v2145 = vpack.c.b16 %v2109, %v2107
        %v2146 = vpack.c.b16 %v2112, %v2110
        %v2147 = vpack.c.b16 %v2113, %v2111
        %v2148 = vpack.c.b16 %v2116, %v2114
        %v2149 = vpack.c.b16 %v2117, %v2115
        %2182 = vmatprep.subr.bf16.mxu0 %v2119
        %2183 = vmatpush1.bf16.msra.mxu0 %v2118
        %2184 = vmatprep.subr.bf16.mxu0 %v2121
        %2185 = vmatpush1.bf16.msra.mxu0 %v2120
        %2186 = vmatprep.subr.bf16.mxu0 %v2123
        %2187 = vmatpush1.bf16.msra.mxu0 %v2122
        %2188 = vmatprep.subr.bf16.mxu0 %v2125
        %2189 = vmatpush1.bf16.msra.mxu0 %v2124
        %2190 = vmatprep.subr.bf16.mxu0 %v2127
        %2191 = vmatpush1.bf16.msra.mxu0 %v2126
        %2192 = vmatprep.subr.bf16.mxu0 %v2129
        %2193 = vmatpush1.bf16.msra.mxu0 %v2128
        %2194 = vmatprep.subr.bf16.mxu0 %v2131
        %2195 = vmatpush1.bf16.msra.mxu0 %v2130
        %2196 = vmatprep.subr.bf16.mxu0 %v2133
        %2197 = vmatpush1.bf16.msra.mxu0 %v2132
        %2198 = vmatprep.subr.bf16.mxu0 %v2135
        %2199 = vmatpush1.bf16.msra.mxu0 %v2134
        %2200 = vmatprep.subr.bf16.mxu0 %v2137
        %2201 = vmatpush1.bf16.msra.mxu0 %v2136
        %2202 = vmatprep.subr.bf16.mxu0 %v2139
        %2203 = vmatpush1.bf16.msra.mxu0 %v2138
        %2204 = vmatprep.subr.bf16.mxu0 %v2141
        %2205 = vmatpush1.bf16.msra.mxu0 %v2140
        %2206 = vmatprep.subr.bf16.mxu0 %v2143
        %2207 = vmatpush1.bf16.msra.mxu0 %v2142
        %2208 = vmatprep.subr.bf16.mxu0 %v2145
        %2209 = vmatpush1.bf16.msra.mxu0 %v2144
        %2210 = vmatprep.subr.bf16.mxu0 %v2147
        %2211 = vmatpush1.bf16.msra.mxu0 %v2146
        %2212 = vmatprep.subr.bf16.mxu0 %v2149
        %2213 = vmatpush1.bf16.msra.mxu0 %v2148
        %2214 = vmatprep.mubr.bf16.mxu0 %v1959
        %2215 = vmatmul.mubr.bf16.gmra.mrb[0].mxu0 %v1958
        %v2216 = vpop.f32.mrb[0].mxu0
        %v2217 = vadd.f32 0.0, %v2216
        %v2218 = vpop.f32.mrb[0].mxu0
        %v2219 = vadd.f32 0.0, %v2218
        %v2220 = vpop.f32.mrb[0].mxu0
        %v2221 = vadd.f32 0.0, %v2220
        %v2222 = vpop.f32.mrb[0].mxu0
        %v2223 = vadd.f32 0.0, %v2222
        %2224 = vmatprep.mubr.bf16.mxu0 %v1961
        %2225 = vmatmul.mubr.bf16.gmra.mrb[0].mxu0 %v1960
        %v2226 = vpop.f32.mrb[0].mxu0
        %v2227 = vadd.f32 0.0, %v2226
        %v2228 = vpop.f32.mrb[0].mxu0
        %v2229 = vadd.f32 0.0, %v2228
        %v2230 = vpop.f32.mrb[0].mxu0
        %v2231 = vadd.f32 0.0, %v2230
        %v2232 = vpop.f32.mrb[0].mxu0
        %v2233 = vadd.f32 0.0, %v2232
        %2234 = vmatprep.mubr.bf16.mxu0 %v1963
        %2235 = vmatmul.mubr.bf16.gmra.mrb[0].mxu0 %v1962
        %v2236 = vpop.f32.mrb[0].mxu0
        %v2237 = vadd.f32 0.0, %v2236
        %v2238 = vpop.f32.mrb[0].mxu0
        %v2239 = vadd.f32 0.0, %v2238
        %v2240 = vpop.f32.mrb[0].mxu0
        %v2241 = vadd.f32 0.0, %v2240
        %v2242 = vpop.f32.mrb[0].mxu0
        %v2243 = vadd.f32 0.0, %v2242
        %2244 = vmatprep.mubr.bf16.mxu0 %v1965
        %2245 = vmatmul.mubr.bf16.gmra.mrb[0].mxu0 %v1964
        %v2246 = vpop.f32.mrb[0].mxu0
        %v2247 = vadd.f32 0.0, %v2246
        %v2248 = vpop.f32.mrb[0].mxu0
        %v2249 = vadd.f32 0.0, %v2248
        %v2250 = vpop.f32.mrb[0].mxu0
        %v2251 = vadd.f32 0.0, %v2250
        %v2252 = vpop.f32.mrb[0].mxu0
        %v2253 = vadd.f32 0.0, %v2252
        %2254 = vmatprep.mubr.bf16.mxu0 %v1967
        %2255 = vmatmul.mubr.bf16.gmra.mrb[0].mxu0 %v1966
        %v2256 = vpop.f32.mrb[0].mxu0
        %v2257 = vadd.f32 0.0, %v2256
        %v2258 = vpop.f32.mrb[0].mxu0
        %v2259 = vadd.f32 0.0, %v2258
        %v2260 = vpop.f32.mrb[0].mxu0
        %v2261 = vadd.f32 0.0, %v2260
        %v2262 = vpop.f32.mrb[0].mxu0
        %v2263 = vadd.f32 0.0, %v2262
        %2264 = vmatprep.mubr.bf16.mxu0 %v1969
        %2265 = vmatmul.mubr.bf16.gmra.mrb[0].mxu0 %v1968
        %v2266 = vpop.f32.mrb[0].mxu0
        %v2267 = vadd.f32 0.0, %v2266
        %v2268 = vpop.f32.mrb[0].mxu0
        %v2269 = vadd.f32 0.0, %v2268
        %v2270 = vpop.f32.mrb[0].mxu0
        %v2271 = vadd.f32 0.0, %v2270
        %v2272 = vpop.f32.mrb[0].mxu0
        %v2273 = vadd.f32 0.0, %v2272
        %2274 = vmatprep.mubr.bf16.mxu0 %v1971
        %2275 = vmatmul.mubr.bf16.gmra.mrb[0].mxu0 %v1970
        %v2276 = vpop.f32.mrb[0].mxu0
        %v2277 = vadd.f32 0.0, %v2276
        %v2278 = vpop.f32.mrb[0].mxu0
        %v2279 = vadd.f32 0.0, %v2278
        %v2280 = vpop.f32.mrb[0].mxu0
        %v2281 = vadd.f32 0.0, %v2280
        %v2282 = vpop.f32.mrb[0].mxu0
        %v2283 = vadd.f32 0.0, %v2282
        %2284 = vmatprep.mubr.bf16.mxu0 %v1973
        %2285 = vmatmul.mubr.bf16.gmra.mrb[0].mxu0 %v1972
        %v2286 = vpop.f32.mrb[0].mxu0
        %v2287 = vadd.f32 0.0, %v2286
        %v2288 = vpop.f32.mrb[0].mxu0
        %v2289 = vadd.f32 0.0, %v2288
        %v2290 = vpop.f32.mrb[0].mxu0
        %v2291 = vadd.f32 0.0, %v2290
        %v2292 = vpop.f32.mrb[0].mxu0
        %v2293 = vadd.f32 0.0, %v2292
        %2294 = vmatprep.mubr.bf16.mxu0 %v1975
        %2295 = vmatmul.mubr.bf16.gmra.mrb[0].mxu0 %v1974
        %v2296 = vpop.f32.mrb[0].mxu0
        %v2297 = vadd.f32 0.0, %v2296
        %v2298 = vpop.f32.mrb[0].mxu0
        %v2299 = vadd.f32 0.0, %v2298
        %v2300 = vpop.f32.mrb[0].mxu0
        %v2301 = vadd.f32 0.0, %v2300
        %v2302 = vpop.f32.mrb[0].mxu0
        %v2303 = vadd.f32 0.0, %v2302
        %2304 = vmatprep.mubr.bf16.mxu0 %v1977
        %2305 = vmatmul.mubr.bf16.gmra.mrb[0].mxu0 %v1976
        %v2306 = vpop.f32.mrb[0].mxu0
        %v2307 = vadd.f32 0.0, %v2306
        %v2308 = vpop.f32.mrb[0].mxu0
        %v2309 = vadd.f32 0.0, %v2308
        %v2310 = vpop.f32.mrb[0].mxu0
        %v2311 = vadd.f32 0.0, %v2310
        %v2312 = vpop.f32.mrb[0].mxu0
        %v2313 = vadd.f32 0.0, %v2312
        %2314 = vmatprep.mubr.bf16.mxu0 %v1979
        %2315 = vmatmul.mubr.bf16.gmra.mrb[0].mxu0 %v1978
        %v2316 = vpop.f32.mrb[0].mxu0
        %v2317 = vadd.f32 0.0, %v2316
        %v2318 = vpop.f32.mrb[0].mxu0
        %v2319 = vadd.f32 0.0, %v2318
        %v2320 = vpop.f32.mrb[0].mxu0
        %v2321 = vadd.f32 0.0, %v2320
        %v2322 = vpop.f32.mrb[0].mxu0
        %v2323 = vadd.f32 0.0, %v2322
        %2324 = vmatprep.mubr.bf16.mxu0 %v1981
        %2325 = vmatmul.mubr.bf16.gmra.mrb[0].mxu0 %v1980
        %v2326 = vpop.f32.mrb[0].mxu0
        %v2327 = vadd.f32 0.0, %v2326
        %v2328 = vpop.f32.mrb[0].mxu0
        %v2329 = vadd.f32 0.0, %v2328
        %v2330 = vpop.f32.mrb[0].mxu0
        %v2331 = vadd.f32 0.0, %v2330
        %v2332 = vpop.f32.mrb[0].mxu0
        %v2333 = vadd.f32 0.0, %v2332
        %2334 = vmatprep.mubr.bf16.mxu0 %v1983
        %2335 = vmatmul.mubr.bf16.gmra.mrb[0].mxu0 %v1982
        %v2336 = vpop.f32.mrb[0].mxu0
        %v2337 = vadd.f32 0.0, %v2336
        %v2338 = vpop.f32.mrb[0].mxu0
        %v2339 = vadd.f32 0.0, %v2338
        %v2340 = vpop.f32.mrb[0].mxu0
        %v2341 = vadd.f32 0.0, %v2340
        %v2342 = vpop.f32.mrb[0].mxu0
        %v2343 = vadd.f32 0.0, %v2342
        %2344 = vmatprep.mubr.bf16.mxu0 %v1985
        %2345 = vmatmul.mubr.bf16.gmra.mrb[0].mxu0 %v1984
        %v2346 = vpop.f32.mrb[0].mxu0
        %v2347 = vadd.f32 0.0, %v2346
        %v2348 = vpop.f32.mrb[0].mxu0
        %v2349 = vadd.f32 0.0, %v2348
        %v2350 = vpop.f32.mrb[0].mxu0
        %v2351 = vadd.f32 0.0, %v2350
        %v2352 = vpop.f32.mrb[0].mxu0
        %v2353 = vadd.f32 0.0, %v2352
        %2354 = vmatprep.mubr.bf16.mxu0 %v1987
        %2355 = vmatmul.mubr.bf16.gmra.mrb[0].mxu0 %v1986
        %v2356 = vpop.f32.mrb[0].mxu0
        %v2357 = vadd.f32 0.0, %v2356
        %v2358 = vpop.f32.mrb[0].mxu0
        %v2359 = vadd.f32 0.0, %v2358
        %v2360 = vpop.f32.mrb[0].mxu0
        %v2361 = vadd.f32 0.0, %v2360
        %v2362 = vpop.f32.mrb[0].mxu0
        %v2363 = vadd.f32 0.0, %v2362
        %2364 = vmatprep.mubr.bf16.mxu0 %v1989
        %2365 = vmatmul.mubr.bf16.gmra.mrb[0].mxu0 %v1988
        %v2366 = vpop.f32.mrb[0].mxu0
        %v2367 = vadd.f32 0.0, %v2366
        %v2368 = vpop.f32.mrb[0].mxu0
        %v2369 = vadd.f32 0.0, %v2368
        %v2370 = vpop.f32.mrb[0].mxu0
        %v2371 = vadd.f32 0.0, %v2370
        %v2372 = vpop.f32.mrb[0].mxu0
        %v2373 = vadd.f32 0.0, %v2372
        %2374 = vdwg.mxu0
        %v2375 = vadd.f32 %v1894, %v2217
        %v2376 = vadd.f32 %v1895, %v2219
        %v2377 = vadd.f32 %v1896, %v2221
        %v2378 = vadd.f32 %v1897, %v2223
        %v2379 = vadd.f32 %v1898, %v2227
        %v2380 = vadd.f32 %v1899, %v2229
        %v2381 = vadd.f32 %v1900, %v2231
        %v2382 = vadd.f32 %v1901, %v2233
        %v2383 = vadd.f32 %v1902, %v2237
        %v2384 = vadd.f32 %v1903, %v2239
        %v2385 = vadd.f32 %v1904, %v2241
        %v2386 = vadd.f32 %v1905, %v2243
        %v2387 = vadd.f32 %v1906, %v2247
        %v2388 = vadd.f32 %v1907, %v2249
        %v2389 = vadd.f32 %v1908, %v2251
        %v2390 = vadd.f32 %v1909, %v2253
        %v2391 = vadd.f32 %v1910, %v2257
        %v2392 = vadd.f32 %v1911, %v2259
        %v2393 = vadd.f32 %v1912, %v2261
        %v2394 = vadd.f32 %v1913, %v2263
        %v2395 = vadd.f32 %v1914, %v2267
        %v2396 = vadd.f32 %v1915, %v2269
        %v2397 = vadd.f32 %v1916, %v2271
        %v2398 = vadd.f32 %v1917, %v2273
        %v2399 = vadd.f32 %v1918, %v2277
        %v2400 = vadd.f32 %v1919, %v2279
        %v2401 = vadd.f32 %v1920, %v2281
        %v2402 = vadd.f32 %v1921, %v2283
        %v2403 = vadd.f32 %v1922, %v2287
        %v2404 = vadd.f32 %v1923, %v2289
        %v2405 = vadd.f32 %v1924, %v2291
        %v2406 = vadd.f32 %v1925, %v2293
        %v2407 = vadd.f32 %v1926, %v2297
        %v2408 = vadd.f32 %v1927, %v2299
        %v2409 = vadd.f32 %v1928, %v2301
        %v2410 = vadd.f32 %v1929, %v2303
        %v2411 = vadd.f32 %v1930, %v2307
        %v2412 = vadd.f32 %v1931, %v2309
        %v2413 = vadd.f32 %v1932, %v2311
        %v2414 = vadd.f32 %v1933, %v2313
        %v2415 = vadd.f32 %v1934, %v2317
        %v2416 = vadd.f32 %v1935, %v2319
        %v2417 = vadd.f32 %v1936, %v2321
        %v2418 = vadd.f32 %v1937, %v2323
        %v2419 = vadd.f32 %v1938, %v2327
        %v2420 = vadd.f32 %v1939, %v2329
        %v2421 = vadd.f32 %v1940, %v2331
        %v2422 = vadd.f32 %v1941, %v2333
        %v2423 = vadd.f32 %v1942, %v2337
        %v2424 = vadd.f32 %v1943, %v2339
        %v2425 = vadd.f32 %v1944, %v2341
        %v2426 = vadd.f32 %v1945, %v2343
        %v2427 = vadd.f32 %v1946, %v2347
        %v2428 = vadd.f32 %v1947, %v2349
        %v2429 = vadd.f32 %v1948, %v2351
        %v2430 = vadd.f32 %v1949, %v2353
        %v2431 = vadd.f32 %v1950, %v2357
        %v2432 = vadd.f32 %v1951, %v2359
        %v2433 = vadd.f32 %v1952, %v2361
        %v2434 = vadd.f32 %v1953, %v2363
        %v2435 = vadd.f32 %v1954, %v2367
        %v2436 = vadd.f32 %v1955, %v2369
        %v2437 = vadd.f32 %v1956, %v2371
        %v2438 = vadd.f32 %v1957, %v2373
        %2439 = vst [vmem:[#allocation2] sm:$0xff] %v2375
        %2440 = vst [vmem:[#allocation2 + $0x8] sm:$0xff] %v2376
        %2441 = vst [vmem:[#allocation2 + $0x10] sm:$0xff] %v2377
        %2442 = vst [vmem:[#allocation2 + $0x18] sm:$0xff] %v2378
        %2443 = vst [vmem:[#allocation2 + $0x20] sm:$0xff] %v2379
        %2444 = vst [vmem:[#allocation2 + $0x28] sm:$0xff] %v2380
        %2445 = vst [vmem:[#allocation2 + $0x30] sm:$0xff] %v2381
        %2446 = vst [vmem:[#allocation2 + $0x38] sm:$0xff] %v2382
        %2447 = vst [vmem:[#allocation2 + $0x40] sm:$0xff] %v2383
        %2448 = vst [vmem:[#allocation2 + $0x48] sm:$0xff] %v2384
        %2449 = vst [vmem:[#allocation2 + $0x50] sm:$0xff] %v2385
        %2450 = vst [vmem:[#allocation2 + $0x58] sm:$0xff] %v2386
        %2451 = vst [vmem:[#allocation2 + $0x60] sm:$0xff] %v2387
        %2452 = vst [vmem:[#allocation2 + $0x68] sm:$0xff] %v2388
        %2453 = vst [vmem:[#allocation2 + $0x70] sm:$0xff] %v2389
        %2454 = vst [vmem:[#allocation2 + $0x78] sm:$0xff] %v2390
        %2455 = vst [vmem:[#allocation2 + $0x80] sm:$0xff] %v2391
        %2456 = vst [vmem:[#allocation2 + $0x88] sm:$0xff] %v2392
        %2457 = vst [vmem:[#allocation2 + $0x90] sm:$0xff] %v2393
        %2458 = vst [vmem:[#allocation2 + $0x98] sm:$0xff] %v2394
        %2459 = vst [vmem:[#allocation2 + $0xa0] sm:$0xff] %v2395
        %2460 = vst [vmem:[#allocation2 + $0xa8] sm:$0xff] %v2396
        %2461 = vst [vmem:[#allocation2 + $0xb0] sm:$0xff] %v2397
        %2462 = vst [vmem:[#allocation2 + $0xb8] sm:$0xff] %v2398
        %2463 = vst [vmem:[#allocation2 + $0xc0] sm:$0xff] %v2399
        %2464 = vst [vmem:[#allocation2 + $0xc8] sm:$0xff] %v2400
        %2465 = vst [vmem:[#allocation2 + $0xd0] sm:$0xff] %v2401
        %2466 = vst [vmem:[#allocation2 + $0xd8] sm:$0xff] %v2402
        %2467 = vst [vmem:[#allocation2 + $0xe0] sm:$0xff] %v2403
        %2468 = vst [vmem:[#allocation2 + $0xe8] sm:$0xff] %v2404
        %2469 = vst [vmem:[#allocation2 + $0xf0] sm:$0xff] %v2405
        %2470 = vst [vmem:[#allocation2 + $0xf8] sm:$0xff] %v2406
        %2471 = vst [vmem:[#allocation2 + $0x100] sm:$0xff] %v2407
        %2472 = vst [vmem:[#allocation2 + $0x108] sm:$0xff] %v2408
        %2473 = vst [vmem:[#allocation2 + $0x110] sm:$0xff] %v2409
        %2474 = vst [vmem:[#allocation2 + $0x118] sm:$0xff] %v2410
        %2475 = vst [vmem:[#allocation2 + $0x120] sm:$0xff] %v2411
        %2476 = vst [vmem:[#allocation2 + $0x128] sm:$0xff] %v2412
        %2477 = vst [vmem:[#allocation2 + $0x130] sm:$0xff] %v2413
        %2478 = vst [vmem:[#allocation2 + $0x138] sm:$0xff] %v2414
        %2479 = vst [vmem:[#allocation2 + $0x140] sm:$0xff] %v2415
        %2480 = vst [vmem:[#allocation2 + $0x148] sm:$0xff] %v2416
        %2481 = vst [vmem:[#allocation2 + $0x150] sm:$0xff] %v2417
        %2482 = vst [vmem:[#allocation2 + $0x158] sm:$0xff] %v2418
        %2483 = vst [vmem:[#allocation2 + $0x160] sm:$0xff] %v2419
        %2484 = vst [vmem:[#allocation2 + $0x168] sm:$0xff] %v2420
        %2485 = vst [vmem:[#allocation2 + $0x170] sm:$0xff] %v2421
        %2486 = vst [vmem:[#allocation2 + $0x178] sm:$0xff] %v2422
        %2487 = vst [vmem:[#allocation2 + $0x180] sm:$0xff] %v2423
        %2488 = vst [vmem:[#allocation2 + $0x188] sm:$0xff] %v2424
        %2489 = vst [vmem:[#allocation2 + $0x190] sm:$0xff] %v2425
        %2490 = vst [vmem:[#allocation2 + $0x198] sm:$0xff] %v2426
        %2491 = vst [vmem:[#allocation2 + $0x1a0] sm:$0xff] %v2427
        %2492 = vst [vmem:[#allocation2 + $0x1a8] sm:$0xff] %v2428
        %2493 = vst [vmem:[#allocation2 + $0x1b0] sm:$0xff] %v2429
        %2494 = vst [vmem:[#allocation2 + $0x1b8] sm:$0xff] %v2430
        %2495 = vst [vmem:[#allocation2 + $0x1c0] sm:$0xff] %v2431
        %2496 = vst [vmem:[#allocation2 + $0x1c8] sm:$0xff] %v2432
        %2497 = vst [vmem:[#allocation2 + $0x1d0] sm:$0xff] %v2433
        %2498 = vst [vmem:[#allocation2 + $0x1d8] sm:$0xff] %v2434
        %2499 = vst [vmem:[#allocation2 + $0x1e0] sm:$0xff] %v2435
        %2500 = vst [vmem:[#allocation2 + $0x1e8] sm:$0xff] %v2436
        %2501 = vst [vmem:[#allocation2 + $0x1f0] sm:$0xff] %v2437
        %2502 = vst [vmem:[#allocation2 + $0x1f8] sm:$0xff] %v2438
        %p2503 = scmp.eq.s32.totalorder %s32, 1
        // Predicated region
        $region57: #{tpu_custom_call.1} parent=35 // pred_check
          %p2504 = pneg %p2503
        $region58: #{tpu_custom_call.1} parent=35 // pred_check_branch
          %2506 = sbr.rel (%p2504) target = $region60
        $region59: #{tpu_custom_call.1} parent=35 // pred_region
          %v2507 = vld [vmem:[#allocation2] sm:$0xff]
          %v2508 = vld [vmem:[#allocation2 + $0x8] sm:$0xff]
          %v2509 = vld [vmem:[#allocation2 + $0x10] sm:$0xff]
          %v2510 = vld [vmem:[#allocation2 + $0x18] sm:$0xff]
          %v2511 = vld [vmem:[#allocation2 + $0x20] sm:$0xff]
          %v2512 = vld [vmem:[#allocation2 + $0x28] sm:$0xff]
          %v2513 = vld [vmem:[#allocation2 + $0x30] sm:$0xff]
          %v2514 = vld [vmem:[#allocation2 + $0x38] sm:$0xff]
          %v2515 = vld [vmem:[#allocation2 + $0x40] sm:$0xff]
          %v2516 = vld [vmem:[#allocation2 + $0x48] sm:$0xff]
          %v2517 = vld [vmem:[#allocation2 + $0x50] sm:$0xff]
          %v2518 = vld [vmem:[#allocation2 + $0x58] sm:$0xff]
          %v2519 = vld [vmem:[#allocation2 + $0x60] sm:$0xff]
          %v2520 = vld [vmem:[#allocation2 + $0x68] sm:$0xff]
          %v2521 = vld [vmem:[#allocation2 + $0x70] sm:$0xff]
          %v2522 = vld [vmem:[#allocation2 + $0x78] sm:$0xff]
          %v2523 = vld [vmem:[#allocation2 + $0x80] sm:$0xff]
          %v2524 = vld [vmem:[#allocation2 + $0x88] sm:$0xff]
          %v2525 = vld [vmem:[#allocation2 + $0x90] sm:$0xff]
          %v2526 = vld [vmem:[#allocation2 + $0x98] sm:$0xff]
          %v2527 = vld [vmem:[#allocation2 + $0xa0] sm:$0xff]
          %v2528 = vld [vmem:[#allocation2 + $0xa8] sm:$0xff]
          %v2529 = vld [vmem:[#allocation2 + $0xb0] sm:$0xff]
          %v2530 = vld [vmem:[#allocation2 + $0xb8] sm:$0xff]
          %v2531 = vld [vmem:[#allocation2 + $0xc0] sm:$0xff]
          %v2532 = vld [vmem:[#allocation2 + $0xc8] sm:$0xff]
          %v2533 = vld [vmem:[#allocation2 + $0xd0] sm:$0xff]
          %v2534 = vld [vmem:[#allocation2 + $0xd8] sm:$0xff]
          %v2535 = vld [vmem:[#allocation2 + $0xe0] sm:$0xff]
          %v2536 = vld [vmem:[#allocation2 + $0xe8] sm:$0xff]
          %v2537 = vld [vmem:[#allocation2 + $0xf0] sm:$0xff]
          %v2538 = vld [vmem:[#allocation2 + $0xf8] sm:$0xff]
          %v2539 = vld [vmem:[#allocation2 + $0x100] sm:$0xff]
          %v2540 = vld [vmem:[#allocation2 + $0x108] sm:$0xff]
          %v2541 = vld [vmem:[#allocation2 + $0x110] sm:$0xff]
          %v2542 = vld [vmem:[#allocation2 + $0x118] sm:$0xff]
          %v2543 = vld [vmem:[#allocation2 + $0x120] sm:$0xff]
          %v2544 = vld [vmem:[#allocation2 + $0x128] sm:$0xff]
          %v2545 = vld [vmem:[#allocation2 + $0x130] sm:$0xff]
          %v2546 = vld [vmem:[#allocation2 + $0x138] sm:$0xff]
          %v2547 = vld [vmem:[#allocation2 + $0x140] sm:$0xff]
          %v2548 = vld [vmem:[#allocation2 + $0x148] sm:$0xff]
          %v2549 = vld [vmem:[#allocation2 + $0x150] sm:$0xff]
          %v2550 = vld [vmem:[#allocation2 + $0x158] sm:$0xff]
          %v2551 = vld [vmem:[#allocation2 + $0x160] sm:$0xff]
          %v2552 = vld [vmem:[#allocation2 + $0x168] sm:$0xff]
          %v2553 = vld [vmem:[#allocation2 + $0x170] sm:$0xff]
          %v2554 = vld [vmem:[#allocation2 + $0x178] sm:$0xff]
          %v2555 = vld [vmem:[#allocation2 + $0x180] sm:$0xff]
          %v2556 = vld [vmem:[#allocation2 + $0x188] sm:$0xff]
          %v2557 = vld [vmem:[#allocation2 + $0x190] sm:$0xff]
          %v2558 = vld [vmem:[#allocation2 + $0x198] sm:$0xff]
          %v2559 = vld [vmem:[#allocation2 + $0x1a0] sm:$0xff]
          %v2560 = vld [vmem:[#allocation2 + $0x1a8] sm:$0xff]
          %v2561 = vld [vmem:[#allocation2 + $0x1b0] sm:$0xff]
          %v2562 = vld [vmem:[#allocation2 + $0x1b8] sm:$0xff]
          %v2563 = vld [vmem:[#allocation2 + $0x1c0] sm:$0xff]
          %v2564 = vld [vmem:[#allocation2 + $0x1c8] sm:$0xff]
          %v2565 = vld [vmem:[#allocation2 + $0x1d0] sm:$0xff]
          %v2566 = vld [vmem:[#allocation2 + $0x1d8] sm:$0xff]
          %v2567 = vld [vmem:[#allocation2 + $0x1e0] sm:$0xff]
          %v2568 = vld [vmem:[#allocation2 + $0x1e8] sm:$0xff]
          %v2569 = vld [vmem:[#allocation2 + $0x1f0] sm:$0xff]
          %v2570 = vld [vmem:[#allocation2 + $0x1f8] sm:$0xff]
          %2571 = vst [vmem:[%s346] sm:$0xff] %v2507
          %2572 = vst [vmem:[%s346 + $0x8] sm:$0xff] %v2508
          %2573 = vst [vmem:[%s346 + $0x10] sm:$0xff] %v2509
          %2574 = vst [vmem:[%s346 + $0x18] sm:$0xff] %v2510
          %2575 = vst [vmem:[%s346 + $0x20] sm:$0xff] %v2511
          %2576 = vst [vmem:[%s346 + $0x28] sm:$0xff] %v2512
          %2577 = vst [vmem:[%s346 + $0x30] sm:$0xff] %v2513
          %2578 = vst [vmem:[%s346 + $0x38] sm:$0xff] %v2514
          %2579 = vst [vmem:[%s346 + $0x40] sm:$0xff] %v2515
          %2580 = vst [vmem:[%s346 + $0x48] sm:$0xff] %v2516
          %2581 = vst [vmem:[%s346 + $0x50] sm:$0xff] %v2517
          %2582 = vst [vmem:[%s346 + $0x58] sm:$0xff] %v2518
          %2583 = vst [vmem:[%s346 + $0x60] sm:$0xff] %v2519
          %2584 = vst [vmem:[%s346 + $0x68] sm:$0xff] %v2520
          %2585 = vst [vmem:[%s346 + $0x70] sm:$0xff] %v2521
          %2586 = vst [vmem:[%s346 + $0x78] sm:$0xff] %v2522
          %2587 = vst [vmem:[%s346 + $0x80] sm:$0xff] %v2523
          %2588 = vst [vmem:[%s346 + $0x88] sm:$0xff] %v2524
          %2589 = vst [vmem:[%s346 + $0x90] sm:$0xff] %v2525
          %2590 = vst [vmem:[%s346 + $0x98] sm:$0xff] %v2526
          %2591 = vst [vmem:[%s346 + $0xa0] sm:$0xff] %v2527
          %2592 = vst [vmem:[%s346 + $0xa8] sm:$0xff] %v2528
          %2593 = vst [vmem:[%s346 + $0xb0] sm:$0xff] %v2529
          %2594 = vst [vmem:[%s346 + $0xb8] sm:$0xff] %v2530
          %2595 = vst [vmem:[%s346 + $0xc0] sm:$0xff] %v2531
          %2596 = vst [vmem:[%s346 + $0xc8] sm:$0xff] %v2532
          %2597 = vst [vmem:[%s346 + $0xd0] sm:$0xff] %v2533
          %2598 = vst [vmem:[%s346 + $0xd8] sm:$0xff] %v2534
          %2599 = vst [vmem:[%s346 + $0xe0] sm:$0xff] %v2535
          %2600 = vst [vmem:[%s346 + $0xe8] sm:$0xff] %v2536
          %2601 = vst [vmem:[%s346 + $0xf0] sm:$0xff] %v2537
          %2602 = vst [vmem:[%s346 + $0xf8] sm:$0xff] %v2538
          %2603 = vst [vmem:[%s346 + $0x100] sm:$0xff] %v2539
          %2604 = vst [vmem:[%s346 + $0x108] sm:$0xff] %v2540
          %2605 = vst [vmem:[%s346 + $0x110] sm:$0xff] %v2541
          %2606 = vst [vmem:[%s346 + $0x118] sm:$0xff] %v2542
          %2607 = vst [vmem:[%s346 + $0x120] sm:$0xff] %v2543
          %2608 = vst [vmem:[%s346 + $0x128] sm:$0xff] %v2544
          %2609 = vst [vmem:[%s346 + $0x130] sm:$0xff] %v2545
          %2610 = vst [vmem:[%s346 + $0x138] sm:$0xff] %v2546
          %2611 = vst [vmem:[%s346 + $0x140] sm:$0xff] %v2547
          %2612 = vst [vmem:[%s346 + $0x148] sm:$0xff] %v2548
          %2613 = vst [vmem:[%s346 + $0x150] sm:$0xff] %v2549
          %2614 = vst [vmem:[%s346 + $0x158] sm:$0xff] %v2550
          %2615 = vst [vmem:[%s346 + $0x160] sm:$0xff] %v2551
          %2616 = vst [vmem:[%s346 + $0x168] sm:$0xff] %v2552
          %2617 = vst [vmem:[%s346 + $0x170] sm:$0xff] %v2553
          %2618 = vst [vmem:[%s346 + $0x178] sm:$0xff] %v2554
          %2619 = vst [vmem:[%s346 + $0x180] sm:$0xff] %v2555
          %2620 = vst [vmem:[%s346 + $0x188] sm:$0xff] %v2556
          %2621 = vst [vmem:[%s346 + $0x190] sm:$0xff] %v2557
          %2622 = vst [vmem:[%s346 + $0x198] sm:$0xff] %v2558
          %2623 = vst [vmem:[%s346 + $0x1a0] sm:$0xff] %v2559
          %2624 = vst [vmem:[%s346 + $0x1a8] sm:$0xff] %v2560
          %2625 = vst [vmem:[%s346 + $0x1b0] sm:$0xff] %v2561
          %2626 = vst [vmem:[%s346 + $0x1b8] sm:$0xff] %v2562
          %2627 = vst [vmem:[%s346 + $0x1c0] sm:$0xff] %v2563
          %2628 = vst [vmem:[%s346 + $0x1c8] sm:$0xff] %v2564
          %2629 = vst [vmem:[%s346 + $0x1d0] sm:$0xff] %v2565
          %2630 = vst [vmem:[%s346 + $0x1d8] sm:$0xff] %v2566
          %2631 = vst [vmem:[%s346 + $0x1e0] sm:$0xff] %v2567
          %2632 = vst [vmem:[%s346 + $0x1e8] sm:$0xff] %v2568
          %2633 = vst [vmem:[%s346 + $0x1f0] sm:$0xff] %v2569
          %2634 = vst [vmem:[%s346 + $0x1f8] sm:$0xff] %v2570
        $region60: #{tpu_custom_call.1} parent=35 // pred_fallthru
          _
        %s2635 = sand.u32 %s151, 1
        %s2636 = scalar_lea.sflag [#allocation5], %s2635
        %s2637 = sand.u32 %s151, 1
        %s2638 = smul.addr %s2637, 512
        %s2639 = scalar_lea.vmem [#allocation11], %s2638
        // Predicated region
        $region61: #{tpu_custom_call.1} parent=35 // pred_check
          %p2640 = pneg %p161
        $region62: #{tpu_custom_call.1} parent=35 // pred_check_branch
          %2642 = sbr.rel (%p2640) target = $region64
        $region63: #{tpu_custom_call.1} parent=35 // pred_region
          %s2643 = smul.u32 32, %s31
          %s2645 = ssub.s32 8192, 8192
          %2646 = vsyncadd %s2636, %s2645
          %s2647 = smul.addr %s2643, 2
          %s2648 = smul.addr %s2647, 128
          %s2649 = scalar_lea.hbm %s4, %s2648
          %s2650 = sshll.u32 %s2639, 4
          %s2651 = int_to_ptr.vmem [resolvable:$true] %s2650
          %2656 = dma.vmem_to_hbm [thread:$0]  %s2651, 8192, %s2649, %s2636, 256, 256, 16
        $region64: #{tpu_custom_call.1} parent=35 // pred_fallthru
          _
      $region36: #{tpu_custom_call.1} parent=5 // pred_fallthru
        _
      %p2657 = scmp.le.s32.totalorder 2, %s22
      // Predicated region
      $region65: #{tpu_custom_call.1} parent=5 // pred_check
        %p2658 = pneg %p2657
      $region66: #{tpu_custom_call.1} parent=5 // pred_check_branch
        %2660 = sbr.rel (%p2658) target = $region68
      $region67: #{tpu_custom_call.1} parent=5 // pred_region
        %s2661 = ssub.s32 %s22, 2
        // Predicated region
        $region69: #{tpu_custom_call.1} parent=67 // pred_check
          %p2662 = pneg %p167
        $region70: #{tpu_custom_call.1} parent=67 // pred_check_branch
          %2664 = sbr.rel (%p2662) target = $region72
        $region71: #{tpu_custom_call.1} parent=67 // pred_region
          %s2665 = sand.u32 %s152, 1
          %s2666 = scalar_lea.sflag [#allocation5], %s2665
          %s2667 = sand.u32 %s152, 1
          %s2668 = smul.addr %s2667, 512
          %s2669 = scalar_lea.vmem [#allocation11], %s2668
          %2670 = dma.done %s2666, 8192
        $region72: #{tpu_custom_call.1} parent=67 // pred_fallthru
          _
      $region68: #{tpu_custom_call.1} parent=5 // pred_fallthru
        _
    $region6: #{tpu_custom_call.1} parent=1 // loop_footer
      %s26 = sadd.s32 1, %s22
    $region7: #{tpu_custom_call.1} parent=1 // loop_footer_branch
      %21 = sbr.rel target = $region3
    $region8: #{tpu_custom_call.1} parent=1 // loop_exit
      _
    %2671 = vsyncpa [#allocation4], 1
    %s2672 = scalar_lea.sflag [#allocation4], 1
    %2673 = vsyncpa %s2672, 1
    %2674 = vsyncpa [#allocation7], 1
    %s2675 = scalar_lea.sflag [#allocation7], 1
    %2676 = vsyncpa %s2675, 1
    %2677 = vsyncpa [#allocation10], 1
    %s2678 = scalar_lea.sflag [#allocation10], 1
    %2679 = vsyncpa %s2678, 1
    %2680 = vsyncpa [#allocation5], 1
    %s2681 = scalar_lea.sflag [#allocation5], 1
    %2682 = vsyncpa %s2681, 1

</llo_original>
